<compile_context>
chip_gen: v6e
topology: v6e:2x2x1
jax: 0.10.0
libtpu: 0.0.40
codegen_flags: <defaults>
</compile_context>

<pallas_src>
import functools

import jax
import jax.numpy as jnp
from jax.experimental import pallas as pl
from jax.experimental.pallas import tpu as pltpu


# ----------------------------------------------------------------------------
# Small helpers
# ----------------------------------------------------------------------------
def _round_up(x, m):
    return ((x + m - 1) // m) * m


def _vmem_capacity_bytes():
    try:
        return int(pltpu.get_tpu_info().vmem_capacity_bytes)
    except Exception:
        return 64 << 20  # conservative (v7x-sized) fallback


def _min_batch_tiles():
    # v4/v5p (megacore) and v7x expose 2 TensorCores to one Pallas program;
    # make sure the "parallel" batch axis has >= 2 blocks there.
    try:
        kind = jax.devices()[0].device_kind.lower()
    except Exception:
        return 1
    return 2 if any(t in kind for t in ("v4", "v5p", "v7")) else 1


def _choose_tm(B, min_tiles, fits, candidates=(512, 256, 128, 64, 32, 16, 8)):
    """Pick a batch tile: fits VMEM, feeds all TensorCores, low padding waste,
    and as few tiles as possible (each tile re-streams every w_mid[l])."""
    B8 = _round_up(max(B, 1), 8)
    feasible = [tm for tm in candidates if fits(tm)] or [8]

    def key(tm):
        pB = _round_up(B8, tm)
        tiles = pB // tm
        waste = pB - B
        meets_cores = (tiles >= min_tiles) or (B8 // 8 < min_tiles)
        low_waste = waste <= max(pB // 8, 8)      # <= ~12.5% padded rows
        return (not meets_cores, not low_waste, tiles, waste, -tm)

    return min(feasible, key=key)


# ----------------------------------------------------------------------------
# Kernel: one grid step == (batch tile i, layer l, w_mid column tile n)
# ----------------------------------------------------------------------------
def _model_block_kernel(x_ref, w_pre_ref, b_pre_ref, w_mid_ref, b_mid_ref,
                        w_post_ref, b_post_ref, *refs,
                        n_layers, n_col_tiles, collect_hidden):
    if collect_hidden:
        out_ref, hid_ref, y_cur_ref, y_nxt_ref = refs
    else:
        out_ref, y_cur_ref, y_nxt_ref = refs
        hid_ref = None

    l = pl.program_id(1)
    n = pl.program_id(2)
    tn = w_mid_ref.shape[-1]          # static column-tile width (multiple of 128)

    # ---- (l==0, n==0): run `pre` for this batch tile and seed the carry -----
    @pl.when((l == 0) & (n == 0))
    def _():
        y0 = jnp.dot(x_ref[...], w_pre_ref[...],
                     preferred_element_type=jnp.float32)
        y_cur_ref[...] = (y0 + b_pre_ref[...].astype(jnp.float32)
                          ).astype(y_cur_ref.dtype)

    # ---- record hidden state entering block l (matches `o.append(y)`) -------
    if collect_hidden:
        @pl.when(n == 0)
        def _():
            hid_ref[...] = y_cur_ref[...].astype(hid_ref.dtype)

    # ---- column tile n of: y_next = relu(y @ W_mid[l] + b_mid[l]) -----------
    # Carry is already in the MXU compute dtype (no per-step re-cast).
    z = jnp.dot(y_cur_ref[...], w_mid_ref[...],
                preferred_element_type=jnp.float32)
    z = jnp.maximum(z + b_mid_ref[...].astype(jnp.float32), 0.0)
    z = z.astype(y_nxt_ref.dtype)
    if n_col_tiles == 1:
        y_nxt_ref[...] = z
    else:
        col = pl.multiple_of(n * tn, tn)
        y_nxt_ref[:, pl.ds(col, tn)] = z

    # ---- end of layer l for this batch tile: promote next -> current --------
    @pl.when(n == n_col_tiles - 1)
    def _():
        y_cur_ref[...] = y_nxt_ref[...]

    # ---- after the last mid layer: run `post` and emit the output tile ------
    @pl.when((l == n_layers - 1) & (n == n_col_tiles - 1))
    def _():
        o = jnp.dot(y_cur_ref[...].astype(w_post_ref.dtype), w_post_ref[...],
                    preferred_element_type=jnp.float32)
        out_ref[...] = (o + b_post_ref[...].astype(jnp.float32)
                        ).astype(out_ref.dtype)


# ----------------------------------------------------------------------------
# One-time parameter preparation (hoisted out of the per-call path)
# ----------------------------------------------------------------------------
def prepare_params(params, compute_dtype=jnp.bfloat16):
    """Pad params to lane-dense shapes and cast to the MXU compute dtype ONCE."""
    w_pre, b_pre, w_mid, b_mid, w_post, b_post = params
    D_in, H = w_pre.shape
    D_out = w_post.shape[1]
    L = w_mid.shape[0]
    assert L >= 1, "Model_BLOCK with empty `ms` not supported by the fused kernel"

    pD_in, pH, pD_out = (_round_up(d, 128) for d in (D_in, H, D_out))

    # Zero-padding is semantics-preserving: padded lanes stay exactly 0 through
    # every Linear + ReLU, and we slice them off at the end.
    w_pre_p = jnp.pad(w_pre, ((0, pD_in - D_in), (0, pH - H))).astype(compute_dtype)
    b_pre_p = jnp.pad(jnp.reshape(b_pre, (1, H)),
                      ((0, 0), (0, pH - H))).astype(jnp.float32)
    w_mid_p = jnp.pad(w_mid, ((0, 0), (0, pH - H), (0, pH - H))).astype(compute_dtype)
    b_mid_p = jnp.pad(jnp.reshape(b_mid, (L, 1, H)),
                      ((0, 0), (0, 0), (0, pH - H))).astype(jnp.float32)
    w_post_p = jnp.pad(w_post, ((0, pH - H), (0, pD_out - D_out))).astype(compute_dtype)
    b_post_p = jnp.pad(jnp.reshape(b_post, (1, D_out)),
                       ((0, 0), (0, pD_out - D_out))).astype(jnp.float32)

    padded = (w_pre_p, b_pre_p, w_mid_p, b_mid_p, w_post_p, b_post_p)
    dims = (int(D_in), int(H), int(D_out))
    return padded, dims


# ----------------------------------------------------------------------------
# Jitted forward implementation
# ----------------------------------------------------------------------------
@functools.partial(jax.jit, static_argnames=("dims", "return_hidden_states",
                                             "single_resident"))
def _forward_impl(x, padded, *, dims, return_hidden_states, single_resident):
    w_pre_p, b_pre_p, w_mid_p, b_mid_p, w_post_p, b_post_p = padded
    D_in, H, D_out = dims
    B = x.shape[0]
    assert x.shape[1] == D_in

    pD_in, pH = w_pre_p.shape
    pD_out = w_post_p.shape[1]
    L = w_mid_p.shape[0]
    compute_dtype = w_pre_p.dtype
    cs = jnp.dtype(compute_dtype).itemsize
    out_dtype = x.dtype
    odt = jnp.dtype(out_dtype).itemsize

    vmem_cap = _vmem_capacity_bytes()

    # ---- column tiling of the streamed w_mid block (v7x 64 MiB portability) --
    wmid_budget = min(16 << 20, vmem_cap // 4)     # for the double-buffered block
    q = pH // 128
    tn_blocks = max(1, min(q, wmid_budget // max(1, 2 * pH * 128 * cs)))
    while q % tn_blocks:
        tn_blocks -= 1
    TN = 128 * tn_blocks
    n_col_tiles = pH // TN

    # ---- batch tile ----------------------------------------------------------
    rb = 1 if single_resident else 2               # resident-weight buffer count

    def est(tm):
        return (2 * tm * pD_in * cs                       # x tile (double-buffered)
                + rb * (pD_in * pH * cs + pH * 4)         # w_pre, b_pre
                + 2 * (pH * TN * cs + TN * 4)             # streamed w_mid/b_mid
                + rb * (pH * pD_out * cs + pD_out * 4)    # w_post, b_post
                + 2 * tm * pD_out * odt                   # out tile
                + (2 * tm * pH * cs if return_hidden_states else 0)
                + 2 * tm * pH * cs)                       # y_cur + y_nxt carries

    fit_budget = int(0.55 * vmem_cap)
    TM = _choose_tm(B, _min_batch_tiles(), lambda tm: est(tm) <= fit_budget)
    pB = _round_up(_round_up(B, 8), TM)
    n_batch_tiles = pB // TM

    xp = jnp.pad(x, ((0, pB - B), (0, pD_in - D_in))).astype(compute_dtype)

    grid = (n_batch_tiles, L, n_col_tiles)

    resident_kwargs = dict(pipeline_mode=pl.Buffered(1)) if single_resident else {}
    in_specs = [
        pl.BlockSpec((TM, pD_in), lambda i, l, n: (i, 0)),                  # x tile
        pl.BlockSpec((pD_in, pH), lambda i, l, n: (0, 0), **resident_kwargs),  # w_pre
        pl.BlockSpec((1, pH), lambda i, l, n: (0, 0), **resident_kwargs),      # b_pre
        pl.BlockSpec((pl.Squeezed(), pH, TN), lambda i, l, n: (l, 0, n)),   # w_mid[l] col n
        pl.BlockSpec((pl.Squeezed(), 1, TN), lambda i, l, n: (l, 0, n)),    # b_mid[l] col n
        pl.BlockSpec((pH, pD_out), lambda i, l, n: (0, 0), **resident_kwargs),  # w_post
        pl.BlockSpec((1, pD_out), lambda i, l, n: (0, 0), **resident_kwargs),   # b_post
    ]
    out_spec_main = pl.BlockSpec((TM, pD_out), lambda i, l, n: (i, 0))

    if return_hidden_states:
        out_shape = (
            jax.ShapeDtypeStruct((pB, pD_out), out_dtype),      # post(y)
            jax.ShapeDtypeStruct((L, pB, pH), compute_dtype),   # stacked hidden states o
        )
        out_specs = (
            out_spec_main,
            pl.BlockSpec((pl.Squeezed(), TM, pH), lambda i, l, n: (l, i, 0)),
        )
    else:
        out_shape = jax.ShapeDtypeStruct((pB, pD_out), out_dtype)
        out_specs = out_spec_main

    # Advisory cost estimate (w_mid is re-streamed once per batch tile).
    flops = 2 * pB * (pD_in * pH + L * pH * pH + pH * pD_out)
    bytes_accessed = int(
        pB * pD_in * cs
        + pD_in * pH * cs + pH * 4
        + n_batch_tiles * L * (pH * pH * cs + pH * 4)
        + pH * pD_out * cs + pD_out * 4
        + pB * pD_out * odt
        + (L * pB * pH * cs if return_hidden_states else 0))
    cost = pl.CostEstimate(flops=int(flops), transcendentals=0,
                           bytes_accessed=bytes_accessed)

    need = est(TM)
    vmem_limit = int(min(max(need + need // 4 + (4 << 20), 32 << 20),
                         (vmem_cap // 8) * 7))

    result = pl.pallas_call(
        functools.partial(_model_block_kernel,
                          n_layers=L,
                          n_col_tiles=n_col_tiles,
                          collect_hidden=return_hidden_states),
        out_shape=out_shape,
        grid=grid,
        in_specs=in_specs,
        out_specs=out_specs,
        scratch_shapes=[
            pltpu.VMEM((TM, pH), compute_dtype),   # y_cur: activation entering layer l
            pltpu.VMEM((TM, pH), compute_dtype),   # y_nxt: activation being built for l+1
        ],
        compiler_params=pltpu.CompilerParams(
            dimension_semantics=("parallel", "arbitrary", "arbitrary"),
            vmem_limit_bytes=vmem_limit),
        cost_estimate=cost,
    )(xp, w_pre_p, b_pre_p, w_mid_p, b_mid_p, w_post_p, b_post_p)

    if return_hidden_states:
        out_p, hid_p = result
        out = out_p[:B, :D_out]
        hiddens = [hid_p[i, :B, :H].astype(out_dtype) for i in range(L)]
        return out, hiddens
    return result[:B, :D_out]


# ----------------------------------------------------------------------------
# Public wrapper (with graceful fallback if Buffered(1) is rejected)
# ----------------------------------------------------------------------------
_RESIDENT_SINGLE_BUFFER = [True]


def model_block_forward(x, prepared, return_hidden_states=False):
    padded, dims = prepared
    if _RESIDENT_SINGLE_BUFFER[0]:
        try:
            return _forward_impl(x, padded, dims=dims,
                                 return_hidden_states=return_hidden_states,
                                 single_resident=True)
        except Exception:
            # TODO(synk): drop this fallback once pl.Buffered(1) single-buffering of
            # the constant-index pre/post weights is confirmed on this JAX build.
            _RESIDENT_SINGLE_BUFFER[0] = False
    return _forward_impl(x, padded, dims=dims,
                         return_hidden_states=return_hidden_states,
                         single_resident=False)


# ----------------------------------------------------------------------------
# Parameter init + pure-JAX reference
# ----------------------------------------------------------------------------
def init_params(key, d_in, hidden, d_out, num_layers):
    ks = jax.random.split(key, 6)
    w_pre = jax.random.normal(ks[0], (d_in, hidden), jnp.float32) * 0.1
    b_pre = jax.random.normal(ks[1], (hidden,), jnp.float32) * 0.1
    w_mid = jax.random.normal(ks[2], (num_layers, hidden, hidden), jnp.float32) * 0.1
    b_mid = jax.random.normal(ks[3], (num_layers, hidden), jnp.float32) * 0.1
    w_post = jax.random.normal(ks[4], (hidden, d_out), jnp.float32) * 0.1
    b_post = jax.random.normal(ks[5], (d_out,), jnp.float32) * 0.1
    return (w_pre, b_pre, w_mid, b_mid, w_post, b_post)


def reference_forward(x, params, return_hidden_states=False):
    """Pure-JAX reference mirroring Model_BLOCK.forward."""
    w_pre, b_pre, w_mid, b_mid, w_post, b_post = params
    y = x @ w_pre + b_pre
    o = []
    for i in range(w_mid.shape[0]):
        o.append(y)
        y = jnp.maximum(y @ w_mid[i] + b_mid[i], 0.0)
    out = y @ w_post + b_post
    if return_hidden_states:
        return out, o
    return out


if __name__ == "__main__":
    B, D_IN, H, D_OUT, L = 16, 32, 48, 24, 3

    key = jax.random.PRNGKey(0)
    kx, kp = jax.random.split(key)
    x = jax.random.normal(kx, (B, D_IN), jnp.float32)
    params = init_params(kp, D_IN, H, D_OUT, L)

    ref_out, ref_hid = reference_forward(x, params, return_hidden_states=True)

    # --- f32 MXU path: tight checks (output, then output + hidden states) ----
    prep_f32 = prepare_params(params, compute_dtype=jnp.float32)

    out = jax.block_until_ready(model_block_forward(x, prep_f32))
    assert out.shape == (B, D_OUT)
    assert jnp.allclose(out, ref_out, atol=1e-4, rtol=1e-4)

    out_h, hiddens = model_block_forward(x, prep_f32, return_hidden_states=True)
    out_h = jax.block_until_ready(out_h)
    assert jnp.allclose(out_h, ref_out, atol=1e-4, rtol=1e-4)
    assert len(hiddens) == L
    for h, rh in zip(hiddens, ref_hid):
        assert h.shape == (B, H)
        assert jnp.allclose(h, rh, atol=1e-4, rtol=1e-4)

    # --- default bf16 MXU path (f32 accumulation): looser tolerance ----------
    prep_bf16 = prepare_params(params)          # compute_dtype defaults to bfloat16
    out_bf16 = jax.block_until_ready(model_block_forward(x, prep_bf16))
    assert out_bf16.shape == (B, D_OUT)
    assert jnp.allclose(out_bf16, ref_out, atol=5e-2, rtol=5e-2)

    print("KERNEL_OK")
</pallas_src>

<mosaic_0001>
module attributes {stable_mosaic.version = 11 : i64} {
  func.func @_model_block_kernel(%arg0: i32, %arg1: i32, %arg2: i32, %arg3: memref<16x128xf32, #tpu.memory_space<vmem>>, %arg4: memref<128x128xf32, #tpu.memory_space<vmem>>, %arg5: memref<1x128xf32, #tpu.memory_space<vmem>>, %arg6: memref<1x128x128xf32, #tpu.memory_space<vmem>>, %arg7: memref<1x1x128xf32, #tpu.memory_space<vmem>>, %arg8: memref<128x128xf32, #tpu.memory_space<vmem>>, %arg9: memref<1x128xf32, #tpu.memory_space<vmem>>, %arg10: memref<16x128xf32, #tpu.memory_space<vmem>>, %arg11: memref<16x128xf32, #tpu.memory_space<vmem>>, %arg12: memref<16x128xf32, #tpu.memory_space<vmem>>) attributes {dimension_semantics = [#tpu.dimension_semantics<parallel>, #tpu.dimension_semantics<arbitrary>, #tpu.dimension_semantics<arbitrary>], iteration_bounds = array<i64: 1, 3, 1>, scalar_prefetch = 0 : i64, scratch_operands = 2 : i64, tpu.core_type = #tpu.core_type<tc>, window_params = [{transform_indices = @transform_0, window_bounds = array<i64: 16, 128>}, {pipeline_mode = #tpu.pipeline_mode<synchronous>, transform_indices = @transform_1, window_bounds = array<i64: 128, 128>}, {pipeline_mode = #tpu.pipeline_mode<synchronous>, transform_indices = @transform_2, window_bounds = array<i64: 1, 128>}, {transform_indices = @transform_3, window_bounds = array<i64: 1, 128, 128>}, {transform_indices = @transform_4, window_bounds = array<i64: 1, 1, 128>}, {pipeline_mode = #tpu.pipeline_mode<synchronous>, transform_indices = @transform_5, window_bounds = array<i64: 128, 128>}, {pipeline_mode = #tpu.pipeline_mode<synchronous>, transform_indices = @transform_6, window_bounds = array<i64: 1, 128>}, {transform_indices = @transform_7, window_bounds = array<i64: 16, 128>}]} {
    %c0_i32 = arith.constant 0 : i32
    %0 = arith.cmpi eq, %arg1, %c0_i32 : i32
    %c0_i32_0 = arith.constant 0 : i32
    %1 = arith.cmpi eq, %arg2, %c0_i32_0 : i32
    %2 = arith.andi %0, %1 : i1
    %3 = arith.extui %2 : i1 to i32
    %c0_i32_1 = arith.constant 0 : i32
    %4 = arith.cmpi ne, %3, %c0_i32_1 : i32
    scf.if %4 {
      %c0_16 = arith.constant 0 : index
      %c0_17 = arith.constant 0 : index
      %24 = vector.load %arg3[%c0_16, %c0_17] : memref<16x128xf32, #tpu.memory_space<vmem>>, vector<16x128xf32>
      %c0_18 = arith.constant 0 : index
      %c0_19 = arith.constant 0 : index
      %25 = vector.load %arg4[%c0_18, %c0_19] : memref<128x128xf32, #tpu.memory_space<vmem>>, vector<128x128xf32>
      %cst_20 = arith.constant dense<0.000000e+00> : vector<16x128xf32>
      %26 = tpu.matmul %24, %25, %cst_20 {dimension_numbers = #tpu.dot_dimension_numbers<[1], [0], [0], [1], [0, 0, 1, 1], [], []>} : vector<16x128xf32>, vector<128x128xf32>, vector<16x128xf32> -> vector<16x128xf32>
      %c0_21 = arith.constant 0 : index
      %c0_22 = arith.constant 0 : index
      %27 = vector.load %arg5[%c0_21, %c0_22] : memref<1x128xf32, #tpu.memory_space<vmem>>, vector<1x128xf32>
      %28 = vector.broadcast %27 : vector<1x128xf32> to vector<16x128xf32>
      %29 = arith.addf %26, %28 : vector<16x128xf32>
      %c0_23 = arith.constant 0 : index
      %c0_24 = arith.constant 0 : index
      %30 = vector.load %arg11[%c0_23, %c0_24] : memref<16x128xf32, #tpu.memory_space<vmem>>, vector<16x128xf32>
      tpu.vector_store %arg11[%c0_23, %c0_24], %29 {strides = array<i32>} : memref<16x128xf32, #tpu.memory_space<vmem>>, vector<16x128xf32>,
    } else {
    }
    %c0 = arith.constant 0 : index
    %c0_2 = arith.constant 0 : index
    %5 = vector.load %arg11[%c0, %c0_2] : memref<16x128xf32, #tpu.memory_space<vmem>>, vector<16x128xf32>
    %c0_3 = arith.constant 0 : index
    %c0_4 = arith.constant 0 : index
    %c0_5 = arith.constant 0 : index
    %6 = vector.load %arg6[%c0_3, %c0_4, %c0_5] : memref<1x128x128xf32, #tpu.memory_space<vmem>>, vector<1x128x128xf32>
    %7 = vector.shape_cast %6 : vector<1x128x128xf32> to vector<128x128xf32>
    %cst = arith.constant dense<0.000000e+00> : vector<16x128xf32>
    %8 = tpu.matmul %5, %7, %cst {dimension_numbers = #tpu.dot_dimension_numbers<[1], [0], [0], [1], [0, 0, 1, 1], [], []>} : vector<16x128xf32>, vector<128x128xf32>, vector<16x128xf32> -> vector<16x128xf32>
    %c0_6 = arith.constant 0 : index
    %c0_7 = arith.constant 0 : index
    %c0_8 = arith.constant 0 : index
    %9 = vector.load %arg7[%c0_6, %c0_7, %c0_8] : memref<1x1x128xf32, #tpu.memory_space<vmem>>, vector<1x1x128xf32>
    %10 = vector.shape_cast %9 : vector<1x1x128xf32> to vector<1x128xf32>
    %11 = vector.broadcast %10 : vector<1x128xf32> to vector<16x128xf32>
    %12 = arith.addf %8, %11 : vector<16x128xf32>
    %cst_9 = arith.constant 0.000000e+00 : f32
    %13 = vector.broadcast %cst_9 : f32 to vector<16x128xf32>
    %14 = arith.maximumf %12, %13 : vector<16x128xf32>
    %c0_10 = arith.constant 0 : index
    %c0_11 = arith.constant 0 : index
    %15 = vector.load %arg12[%c0_10, %c0_11] : memref<16x128xf32, #tpu.memory_space<vmem>>, vector<16x128xf32>
    tpu.vector_store %arg12[%c0_10, %c0_11], %14 {strides = array<i32>} : memref<16x128xf32, #tpu.memory_space<vmem>>, vector<16x128xf32>,
    %c0_i32_12 = arith.constant 0 : i32
    %16 = arith.cmpi eq, %arg2, %c0_i32_12 : i32
    %17 = arith.extui %16 : i1 to i32
    %c0_i32_13 = arith.constant 0 : i32
    %18 = arith.cmpi ne, %17, %c0_i32_13 : i32
    scf.if %18 {
      %c0_16 = arith.constant 0 : index
      %c0_17 = arith.constant 0 : index
      %24 = vector.load %arg12[%c0_16, %c0_17] : memref<16x128xf32, #tpu.memory_space<vmem>>, vector<16x128xf32>
      %c0_18 = arith.constant 0 : index
      %c0_19 = arith.constant 0 : index
      %25 = vector.load %arg11[%c0_18, %c0_19] : memref<16x128xf32, #tpu.memory_space<vmem>>, vector<16x128xf32>
      tpu.vector_store %arg11[%c0_18, %c0_19], %24 {strides = array<i32>} : memref<16x128xf32, #tpu.memory_space<vmem>>, vector<16x128xf32>,
    } else {
    }
    %c2_i32 = arith.constant 2 : i32
    %19 = arith.cmpi eq, %arg1, %c2_i32 : i32
    %c0_i32_14 = arith.constant 0 : i32
    %20 = arith.cmpi eq, %arg2, %c0_i32_14 : i32
    %21 = arith.andi %19, %20 : i1
    %22 = arith.extui %21 : i1 to i32
    %c0_i32_15 = arith.constant 0 : i32
    %23 = arith.cmpi ne, %22, %c0_i32_15 : i32
    scf.if %23 {
      %c0_16 = arith.constant 0 : index
      %c0_17 = arith.constant 0 : index
      %24 = vector.load %arg11[%c0_16, %c0_17] : memref<16x128xf32, #tpu.memory_space<vmem>>, vector<16x128xf32>
      %c0_18 = arith.constant 0 : index
      %c0_19 = arith.constant 0 : index
      %25 = vector.load %arg8[%c0_18, %c0_19] : memref<128x128xf32, #tpu.memory_space<vmem>>, vector<128x128xf32>
      %cst_20 = arith.constant dense<0.000000e+00> : vector<16x128xf32>
      %26 = tpu.matmul %24, %25, %cst_20 {dimension_numbers = #tpu.dot_dimension_numbers<[1], [0], [0], [1], [0, 0, 1, 1], [], []>} : vector<16x128xf32>, vector<128x128xf32>, vector<16x128xf32> -> vector<16x128xf32>
      %c0_21 = arith.constant 0 : index
      %c0_22 = arith.constant 0 : index
      %27 = vector.load %arg9[%c0_21, %c0_22] : memref<1x128xf32, #tpu.memory_space<vmem>>, vector<1x128xf32>
      %28 = vector.broadcast %27 : vector<1x128xf32> to vector<16x128xf32>
      %29 = arith.addf %26, %28 : vector<16x128xf32>
      %c0_23 = arith.constant 0 : index
      %c0_24 = arith.constant 0 : index
      %30 = vector.load %arg10[%c0_23, %c0_24] : memref<16x128xf32, #tpu.memory_space<vmem>>, vector<16x128xf32>
      tpu.vector_store %arg10[%c0_23, %c0_24], %29 {strides = array<i32>} : memref<16x128xf32, #tpu.memory_space<vmem>>, vector<16x128xf32>,
    } else {
    }
    return
  }
  func.func @transform_0(%arg0: i32, %arg1: i32, %arg2: i32) -> (i32, i32) {
    %c0_i32 = arith.constant 0 : i32
    %c0_i32_0 = arith.constant 0 : i32
    return %arg0, %c0_i32 : i32, i32
  }
  func.func @transform_1(%arg0: i32, %arg1: i32, %arg2: i32) -> (i32, i32) {
    %c0_i32 = arith.constant 0 : i32
    %c0_i32_0 = arith.constant 0 : i32
    %c0_i32_1 = arith.constant 0 : i32
    return %c0_i32, %c0_i32_0 : i32, i32
  }
  func.func @transform_2(%arg0: i32, %arg1: i32, %arg2: i32) -> (i32, i32) {
    %c0_i32 = arith.constant 0 : i32
    %c0_i32_0 = arith.constant 0 : i32
    %c0_i32_1 = arith.constant 0 : i32
    return %c0_i32, %c0_i32_0 : i32, i32
  }
  func.func @transform_3(%arg0: i32, %arg1: i32, %arg2: i32) -> (i32, i32, i32) {
    %c0_i32 = arith.constant 0 : i32
    %c0_i32_0 = arith.constant 0 : i32
    return %arg1, %c0_i32, %arg2 : i32, i32, i32
  }
  func.func @transform_4(%arg0: i32, %arg1: i32, %arg2: i32) -> (i32, i32, i32) {
    %c0_i32 = arith.constant 0 : i32
    %c0_i32_0 = arith.constant 0 : i32
    return %arg1, %c0_i32, %arg2 : i32, i32, i32
  }
  func.func @transform_5(%arg0: i32, %arg1: i32, %arg2: i32) -> (i32, i32) {
    %c0_i32 = arith.constant 0 : i32
    %c0_i32_0 = arith.constant 0 : i32
    %c0_i32_1 = arith.constant 0 : i32
    return %c0_i32, %c0_i32_0 : i32, i32
  }
  func.func @transform_6(%arg0: i32, %arg1: i32, %arg2: i32) -> (i32, i32) {
    %c0_i32 = arith.constant 0 : i32
    %c0_i32_0 = arith.constant 0 : i32
    %c0_i32_1 = arith.constant 0 : i32
    return %c0_i32, %c0_i32_0 : i32, i32
  }
  func.func @transform_7(%arg0: i32, %arg1: i32, %arg2: i32) -> (i32, i32) {
    %c0_i32 = arith.constant 0 : i32
    %c0_i32_0 = arith.constant 0 : i32
    return %arg0, %c0_i32 : i32, i32
  }
}

module attributes {stable_mosaic.version = 11 : i64} {
  func.func @_model_block_kernel(%arg0: i32, %arg1: i32, %arg2: i32, %arg3: memref<16x128xf32, #tpu.memory_space<vmem>>, %arg4: memref<128x128xf32, #tpu.memory_space<vmem>>, %arg5: memref<1x128xf32, #tpu.memory_space<vmem>>, %arg6: memref<1x128x128xf32, #tpu.memory_space<vmem>>, %arg7: memref<1x1x128xf32, #tpu.memory_space<vmem>>, %arg8: memref<128x128xf32, #tpu.memory_space<vmem>>, %arg9: memref<1x128xf32, #tpu.memory_space<vmem>>, %arg10: memref<16x128xf32, #tpu.memory_space<vmem>>, %arg11: memref<16x128xf32, #tpu.memory_space<vmem>>, %arg12: memref<16x128xf32, #tpu.memory_space<vmem>>) attributes {dimension_semantics = [#tpu.dimension_semantics<parallel>, #tpu.dimension_semantics<arbitrary>, #tpu.dimension_semantics<arbitrary>], iteration_bounds = array<i64: 1, 3, 1>, scalar_prefetch = 0 : i64, scratch_operands = 2 : i64, tpu.core_type = #tpu.core_type<tc>, window_params = [{transform_indices = @transform_0, window_bounds = array<i64: 16, 128>}, {pipeline_mode = #tpu.pipeline_mode<synchronous>, transform_indices = @transform_1, window_bounds = array<i64: 128, 128>}, {pipeline_mode = #tpu.pipeline_mode<synchronous>, transform_indices = @transform_2, window_bounds = array<i64: 1, 128>}, {transform_indices = @transform_3, window_bounds = array<i64: 1, 128, 128>}, {transform_indices = @transform_4, window_bounds = array<i64: 1, 1, 128>}, {pipeline_mode = #tpu.pipeline_mode<synchronous>, transform_indices = @transform_5, window_bounds = array<i64: 128, 128>}, {pipeline_mode = #tpu.pipeline_mode<synchronous>, transform_indices = @transform_6, window_bounds = array<i64: 1, 128>}, {transform_indices = @transform_7, window_bounds = array<i64: 16, 128>}]} {
    %c0_i32 = arith.constant 0 : i32
    %0 = arith.cmpi eq, %arg1, %c0_i32 : i32
    %c0_i32_0 = arith.constant 0 : i32
    %1 = arith.cmpi eq, %arg2, %c0_i32_0 : i32
    %2 = arith.andi %0, %1 : i1
    %3 = arith.extui %2 : i1 to i32
    %c0_i32_1 = arith.constant 0 : i32
    %4 = arith.cmpi ne, %3, %c0_i32_1 : i32
    scf.if %4 {
      %c0_16 = arith.constant 0 : index
      %c0_17 = arith.constant 0 : index
      %24 = vector.load %arg3[%c0_16, %c0_17] : memref<16x128xf32, #tpu.memory_space<vmem>>, vector<16x128xf32>
      %c0_18 = arith.constant 0 : index
      %c0_19 = arith.constant 0 : index
      %25 = vector.load %arg4[%c0_18, %c0_19] : memref<128x128xf32, #tpu.memory_space<vmem>>, vector<128x128xf32>
      %cst_20 = arith.constant dense<0.000000e+00> : vector<16x128xf32>
      %26 = tpu.matmul %24, %25, %cst_20 {dimension_numbers = #tpu.dot_dimension_numbers<[1], [0], [0], [1], [0, 0, 1, 1], [], []>} : vector<16x128xf32>, vector<128x128xf32>, vector<16x128xf32> -> vector<16x128xf32>
      %c0_21 = arith.constant 0 : index
      %c0_22 = arith.constant 0 : index
      %27 = vector.load %arg5[%c0_21, %c0_22] : memref<1x128xf32, #tpu.memory_space<vmem>>, vector<1x128xf32>
      %28 = vector.broadcast %27 : vector<1x128xf32> to vector<16x128xf32>
      %29 = arith.addf %26, %28 : vector<16x128xf32>
      %c0_23 = arith.constant 0 : index
      %c0_24 = arith.constant 0 : index
      %30 = vector.load %arg11[%c0_23, %c0_24] : memref<16x128xf32, #tpu.memory_space<vmem>>, vector<16x128xf32>
      tpu.vector_store %arg11[%c0_23, %c0_24], %29 {strides = array<i32>} : memref<16x128xf32, #tpu.memory_space<vmem>>, vector<16x128xf32>,
    } else {
    }
    %c0 = arith.constant 0 : index
    %c0_2 = arith.constant 0 : index
    %5 = vector.load %arg11[%c0, %c0_2] : memref<16x128xf32, #tpu.memory_space<vmem>>, vector<16x128xf32>
    %c0_3 = arith.constant 0 : index
    %c0_4 = arith.constant 0 : index
    %c0_5 = arith.constant 0 : index
    %6 = vector.load %arg6[%c0_3, %c0_4, %c0_5] : memref<1x128x128xf32, #tpu.memory_space<vmem>>, vector<1x128x128xf32>
    %7 = vector.shape_cast %6 : vector<1x128x128xf32> to vector<128x128xf32>
    %cst = arith.constant dense<0.000000e+00> : vector<16x128xf32>
    %8 = tpu.matmul %5, %7, %cst {dimension_numbers = #tpu.dot_dimension_numbers<[1], [0], [0], [1], [0, 0, 1, 1], [], []>} : vector<16x128xf32>, vector<128x128xf32>, vector<16x128xf32> -> vector<16x128xf32>
    %c0_6 = arith.constant 0 : index
    %c0_7 = arith.constant 0 : index
    %c0_8 = arith.constant 0 : index
    %9 = vector.load %arg7[%c0_6, %c0_7, %c0_8] : memref<1x1x128xf32, #tpu.memory_space<vmem>>, vector<1x1x128xf32>
    %10 = vector.shape_cast %9 : vector<1x1x128xf32> to vector<1x128xf32>
    %11 = vector.broadcast %10 : vector<1x128xf32> to vector<16x128xf32>
    %12 = arith.addf %8, %11 : vector<16x128xf32>
    %cst_9 = arith.constant 0.000000e+00 : f32
    %13 = vector.broadcast %cst_9 : f32 to vector<16x128xf32>
    %14 = arith.maximumf %12, %13 : vector<16x128xf32>
    %c0_10 = arith.constant 0 : index
    %c0_11 = arith.constant 0 : index
    %15 = vector.load %arg12[%c0_10, %c0_11] : memref<16x128xf32, #tpu.memory_space<vmem>>, vector<16x128xf32>
    tpu.vector_store %arg12[%c0_10, %c0_11], %14 {strides = array<i32>} : memref<16x128xf32, #tpu.memory_space<vmem>>, vector<16x128xf32>,
    %c0_i32_12 = arith.constant 0 : i32
    %16 = arith.cmpi eq, %arg2, %c0_i32_12 : i32
    %17 = arith.extui %16 : i1 to i32
    %c0_i32_13 = arith.constant 0 : i32
    %18 = arith.cmpi ne, %17, %c0_i32_13 : i32
    scf.if %18 {
      %c0_16 = arith.constant 0 : index
      %c0_17 = arith.constant 0 : index
      %24 = vector.load %arg12[%c0_16, %c0_17] : memref<16x128xf32, #tpu.memory_space<vmem>>, vector<16x128xf32>
      %c0_18 = arith.constant 0 : index
      %c0_19 = arith.constant 0 : index
      %25 = vector.load %arg11[%c0_18, %c0_19] : memref<16x128xf32, #tpu.memory_space<vmem>>, vector<16x128xf32>
      tpu.vector_store %arg11[%c0_18, %c0_19], %24 {strides = array<i32>} : memref<16x128xf32, #tpu.memory_space<vmem>>, vector<16x128xf32>,
    } else {
    }
    %c2_i32 = arith.constant 2 : i32
    %19 = arith.cmpi eq, %arg1, %c2_i32 : i32
    %c0_i32_14 = arith.constant 0 : i32
    %20 = arith.cmpi eq, %arg2, %c0_i32_14 : i32
    %21 = arith.andi %19, %20 : i1
    %22 = arith.extui %21 : i1 to i32
    %c0_i32_15 = arith.constant 0 : i32
    %23 = arith.cmpi ne, %22, %c0_i32_15 : i32
    scf.if %23 {
      %c0_16 = arith.constant 0 : index
      %c0_17 = arith.constant 0 : index
      %24 = vector.load %arg11[%c0_16, %c0_17] : memref<16x128xf32, #tpu.memory_space<vmem>>, vector<16x128xf32>
      %c0_18 = arith.constant 0 : index
      %c0_19 = arith.constant 0 : index
      %25 = vector.load %arg8[%c0_18, %c0_19] : memref<128x128xf32, #tpu.memory_space<vmem>>, vector<128x128xf32>
      %cst_20 = arith.constant dense<0.000000e+00> : vector<16x128xf32>
      %26 = tpu.matmul %24, %25, %cst_20 {dimension_numbers = #tpu.dot_dimension_numbers<[1], [0], [0], [1], [0, 0, 1, 1], [], []>} : vector<16x128xf32>, vector<128x128xf32>, vector<16x128xf32> -> vector<16x128xf32>
      %c0_21 = arith.constant 0 : index
      %c0_22 = arith.constant 0 : index
      %27 = vector.load %arg9[%c0_21, %c0_22] : memref<1x128xf32, #tpu.memory_space<vmem>>, vector<1x128xf32>
      %28 = vector.broadcast %27 : vector<1x128xf32> to vector<16x128xf32>
      %29 = arith.addf %26, %28 : vector<16x128xf32>
      %c0_23 = arith.constant 0 : index
      %c0_24 = arith.constant 0 : index
      %30 = vector.load %arg10[%c0_23, %c0_24] : memref<16x128xf32, #tpu.memory_space<vmem>>, vector<16x128xf32>
      tpu.vector_store %arg10[%c0_23, %c0_24], %29 {strides = array<i32>} : memref<16x128xf32, #tpu.memory_space<vmem>>, vector<16x128xf32>,
    } else {
    }
    return
  }
  func.func @transform_0(%arg0: i32, %arg1: i32, %arg2: i32) -> (i32, i32) {
    %c0_i32 = arith.constant 0 : i32
    %c0_i32_0 = arith.constant 0 : i32
    return %arg0, %c0_i32 : i32, i32
  }
  func.func @transform_1(%arg0: i32, %arg1: i32, %arg2: i32) -> (i32, i32) {
    %c0_i32 = arith.constant 0 : i32
    %c0_i32_0 = arith.constant 0 : i32
    %c0_i32_1 = arith.constant 0 : i32
    return %c0_i32, %c0_i32_0 : i32, i32
  }
  func.func @transform_2(%arg0: i32, %arg1: i32, %arg2: i32) -> (i32, i32) {
    %c0_i32 = arith.constant 0 : i32
    %c0_i32_0 = arith.constant 0 : i32
    %c0_i32_1 = arith.constant 0 : i32
    return %c0_i32, %c0_i32_0 : i32, i32
  }
  func.func @transform_3(%arg0: i32, %arg1: i32, %arg2: i32) -> (i32, i32, i32) {
    %c0_i32 = arith.constant 0 : i32
    %c0_i32_0 = arith.constant 0 : i32
    return %arg1, %c0_i32, %arg2 : i32, i32, i32
  }
  func.func @transform_4(%arg0: i32, %arg1: i32, %arg2: i32) -> (i32, i32, i32) {
    %c0_i32 = arith.constant 0 : i32
    %c0_i32_0 = arith.constant 0 : i32
    return %arg1, %c0_i32, %arg2 : i32, i32, i32
  }
  func.func @transform_5(%arg0: i32, %arg1: i32, %arg2: i32) -> (i32, i32) {
    %c0_i32 = arith.constant 0 : i32
    %c0_i32_0 = arith.constant 0 : i32
    %c0_i32_1 = arith.constant 0 : i32
    return %c0_i32, %c0_i32_0 : i32, i32
  }
  func.func @transform_6(%arg0: i32, %arg1: i32, %arg2: i32) -> (i32, i32) {
    %c0_i32 = arith.constant 0 : i32
    %c0_i32_0 = arith.constant 0 : i32
    %c0_i32_1 = arith.constant 0 : i32
    return %c0_i32, %c0_i32_0 : i32, i32
  }
  func.func @transform_7(%arg0: i32, %arg1: i32, %arg2: i32) -> (i32, i32) {
    %c0_i32 = arith.constant 0 : i32
    %c0_i32_0 = arith.constant 0 : i32
    return %arg0, %c0_i32 : i32, i32
  }
}

</mosaic_0001>

<llo_original>
// kernel: _forward_impl.1
$region0: #{_forward_impl.1}
  #allocation0 [shape = 'u32[]', space=smem, size = 0x4, offset = 0x4, fixed_abs, tag = 'smem constant byte address 0x4 - core index']
  #allocation1 [shape = 'u32[144,128]{1,0:T(1,128)}', space=vmem, size = 0x12000, scoped, tag = 'internal scratch']
  #allocation2 [shape = 'f32[16,128]{1,0:T(8,128)}', space=vmem, size = 0x2000, scoped, tag = 'scratch operand']
  #allocation3 [shape = 'f32[16,128]{1,0:T(8,128)}', space=vmem, size = 0x2000, scoped, tag = 'scratch operand']
  %s0 = inlined_call_operand.vmem [shape: f32[16,128], index: 0, kind: input, shape index: {}]
  %s1 = inlined_call_operand.hbm [shape: f32[128,128], index: 1, kind: input, shape index: {}]
  %s2 = inlined_call_operand.vmem [shape: f32[1,128], index: 2, kind: input, shape index: {}]
  %s3 = inlined_call_operand.hbm [shape: f32[3,128,128], index: 3, kind: input, shape index: {}]
  %s4 = inlined_call_operand.vmem [shape: f32[3,1,128], index: 4, kind: input, shape index: {}]
  %s5 = inlined_call_operand.hbm [shape: f32[128,128], index: 5, kind: input, shape index: {}]
  %s6 = inlined_call_operand.vmem [shape: f32[1,128], index: 6, kind: input, shape index: {}]
  %s7 = inlined_call_operand.hbm [shape: f32[16,128], index: 7, kind: output, shape index: {}]
  %s8 = sld [smem:[#allocation0]]
  $region85: #{_forward_impl.1} parent=0
    _
  %s10 = ssub.s32 1, %s8
  %s11 = scalar_select 0, %s10, %s8
  $region1: #{_forward_impl.1} parent=0
    #allocation4 [shape = 'u8[65536]{0}', space=vmem, size = 0x10000, scoped, tag = 'input window, operand 1, single buffered']
    #allocation5 [shape = 's32[2]{0}', space=sflag, size = 0x8, scoped, tag = 'scoped memory for _forward_impl.1']
    #allocation6 [shape = 's32[2]{0}', space=sflag, size = 0x8, scoped, tag = 'scoped memory for _forward_impl.1']
    #allocation7 [shape = 'u8[131072]{0}', space=vmem, size = 0x20000, scoped, tag = 'input window, operand 3']
    #allocation8 [shape = 's32[2]{0}', space=sflag, size = 0x8, scoped, tag = 'scoped memory for _forward_impl.1']
    #allocation9 [shape = 'u8[65536]{0}', space=vmem, size = 0x10000, scoped, tag = 'input window, operand 5, single buffered']
    #allocation10 [shape = 'u8[8192]{0}', space=vmem, size = 0x2000, scoped, tag = 'output window, operand 0, single buffered']
    %12 = vsyncpa [#allocation5], 0
    %13 = vsyncpa [#allocation8], 0
    %s14 = scalar_lea.sflag [#allocation8], 1
    %15 = vsyncpa %s14, 0
    %16 = vsyncpa [#allocation6], 0
    loop: start=0, step=1, limit=5
    $region2: #{_forward_impl.1} parent=1 // loop_pre_header
      _
    $region3: #{_forward_impl.1} parent=1 // loop_header
      %s18 = sphi 0, %s22
      %p19 = scmp.ge.s32.totalorder %s18, 5
      %s25 = sphi 0, %s44
      %s26 = sphi 0, %s40
      %s27 = sphi 0, %s36
      %s28 = sphi 0, %s25
      %s29 = sphi 0, %s26
      %s30 = sphi 0, %s27
      %s31 = sphi 0, %s28
      %s32 = sphi 0, %s29
      %s33 = sphi 0, %s30
      %s47 = sphi 0, %s49
      %s50 = sphi 0, %s47
      %s51 = sphi 0, %s50
      %s67 = sphi 0, %s51
      %s71 = sphi 0, %s71
      %s73 = sphi 0, %s71
      %s74 = sphi 0, %s73
      %s88 = sphi 0, %s74
      %s92 = sphi 0, %s92
      %s94 = sphi 0, %s92
      %s95 = sphi 0, %s94
      %s109 = sphi 0, %s95
      %s117 = sphi 0, %s119
      %s120 = sphi 0, %s117
      %s121 = sphi 0, %s120
      %s137 = sphi 0, %s121
      %s145 = sphi 0, %s147
      %s148 = sphi 0, %s145
      %s149 = sphi 0, %s148
      %s165 = sphi 0, %s149
      %s169 = sphi 0, %s169
      %s171 = sphi 0, %s169
      %s172 = sphi 0, %s171
      %s186 = sphi 0, %s172
      %s190 = sphi 0, %s190
      %s192 = sphi 0, %s190
      %s193 = sphi 0, %s192
      %s207 = sphi 0, %s193
      %s213 = sphi 0, %s215
      %s216 = sphi 0, %s213
      %s217 = sphi 0, %s216
      %s233 = sphi 0, %s217
    $region4: #{_forward_impl.1} parent=1 // loop_header_branch
      %21 = sbr.rel (%p19) target = $region8
    $region5: #{_forward_impl.1} parent=1 // loop_body
      %s23 = ssub.s32 %s18, 1
      %s24 = ssub.s32 %s18, 2
      %s34 = sadd.s32 1, %s27
      %p35 = scmp.ge.s32.totalorder %s34, 1
      %s36 = scalar_select %p35, 0, %s34
      %s37 = sadd.s32 1, %s26
      %s38 = scalar_select %p35, %s37, %s26
      %p39 = scmp.ge.s32.totalorder %s38, 3
      %s40 = scalar_select %p39, 0, %s38
      %s41 = sadd.s32 1, %s25
      %s42 = scalar_select %p39, %s41, %s25
      %p43 = scmp.ge.s32.totalorder %s42, 1
      %s44 = scalar_select %p43, 0, %s42
      %s45 = ssub.s32 %s25, %s44
      %p46 = scmp.eq.s32.totalorder %s45, 0
      %s48 = sadd.s32 %s47, 1
      %s49 = scalar_select %p46, %s47, %s48
      %p52 = pneg %p46
      %p53 = scmp.eq.s32.totalorder %s18, 2
      %p54 = por %p52, %p53
      %p55 = scmp.ne.s32.totalorder %s47, %s50
      %p56 = scmp.eq.s32.totalorder %s18, 0
      %p57 = por %p55, %p56
      %p58 = scmp.ne.s32.totalorder %s47, %s50
      %p59 = scmp.eq.s32.totalorder %s23, 2
      %p60 = por %p58, %p59
      %p61 = scmp.ne.s32.totalorder %s50, %s51
      %p62 = scmp.eq.s32.totalorder %s23, 0
      %p63 = por %p61, %p62
      %p64 = scmp.ne.s32.totalorder %s50, %s51
      %p65 = scmp.eq.s32.totalorder %s24, 2
      %p66 = por %p64, %p65
      %p68 = scmp.ne.s32.totalorder %s51, %s67
      %p69 = scmp.eq.s32.totalorder %s24, 0
      %p70 = por %p68, %p69
      %s72 = sadd.s32 %s71, 1
      %p75 = scmp.eq.s32.totalorder %s18, 2
      %p76 = scmp.ne.s32.totalorder %s71, %s73
      %p77 = scmp.eq.s32.totalorder %s18, 0
      %p78 = por %p76, %p77
      %p79 = scmp.ne.s32.totalorder %s71, %s73
      %p80 = scmp.eq.s32.totalorder %s23, 2
      %p81 = por %p79, %p80
      %p82 = scmp.ne.s32.totalorder %s73, %s74
      %p83 = scmp.eq.s32.totalorder %s23, 0
      %p84 = por %p82, %p83
      %p85 = scmp.ne.s32.totalorder %s73, %s74
      %p86 = scmp.eq.s32.totalorder %s24, 2
      %p87 = por %p85, %p86
      %p89 = scmp.ne.s32.totalorder %s74, %s88
      %p90 = scmp.eq.s32.totalorder %s24, 0
      %p91 = por %p89, %p90
      %s93 = sadd.s32 %s92, 1
      %p96 = scmp.eq.s32.totalorder %s18, 2
      %p97 = scmp.ne.s32.totalorder %s92, %s94
      %p98 = scmp.eq.s32.totalorder %s18, 0
      %p99 = por %p97, %p98
      %p100 = scmp.ne.s32.totalorder %s92, %s94
      %p101 = scmp.eq.s32.totalorder %s23, 2
      %p102 = por %p100, %p101
      %p103 = scmp.ne.s32.totalorder %s94, %s95
      %p104 = scmp.eq.s32.totalorder %s23, 0
      %p105 = por %p103, %p104
      %p106 = scmp.ne.s32.totalorder %s94, %s95
      %p107 = scmp.eq.s32.totalorder %s24, 2
      %p108 = por %p106, %p107
      %p110 = scmp.ne.s32.totalorder %s95, %s109
      %p111 = scmp.eq.s32.totalorder %s24, 0
      %p112 = por %p110, %p111
      %s113 = ssub.s32 %s26, %s40
      %s114 = ssub.s32 %s27, %s36
      %s115 = sor.u32 %s113, %s114
      %p116 = scmp.eq.s32.totalorder %s115, 0
      %s118 = sadd.s32 %s117, 1
      %s119 = scalar_select %p116, %s117, %s118
      %p122 = pneg %p116
      %p123 = scmp.eq.s32.totalorder %s18, 2
      %p124 = por %p122, %p123
      %p125 = scmp.ne.s32.totalorder %s117, %s120
      %p126 = scmp.eq.s32.totalorder %s18, 0
      %p127 = por %p125, %p126
      %p128 = scmp.ne.s32.totalorder %s117, %s120
      %p129 = scmp.eq.s32.totalorder %s23, 2
      %p130 = por %p128, %p129
      %p131 = scmp.ne.s32.totalorder %s120, %s121
      %p132 = scmp.eq.s32.totalorder %s23, 0
      %p133 = por %p131, %p132
      %p134 = scmp.ne.s32.totalorder %s120, %s121
      %p135 = scmp.eq.s32.totalorder %s24, 2
      %p136 = por %p134, %p135
      %p138 = scmp.ne.s32.totalorder %s121, %s137
      %p139 = scmp.eq.s32.totalorder %s24, 0
      %p140 = por %p138, %p139
      %s141 = ssub.s32 %s26, %s40
      %s142 = ssub.s32 %s27, %s36
      %s143 = sor.u32 %s141, %s142
      %p144 = scmp.eq.s32.totalorder %s143, 0
      %s146 = sadd.s32 %s145, 1
      %s147 = scalar_select %p144, %s145, %s146
      %p150 = pneg %p144
      %p151 = scmp.eq.s32.totalorder %s18, 2
      %p152 = por %p150, %p151
      %p153 = scmp.ne.s32.totalorder %s145, %s148
      %p154 = scmp.eq.s32.totalorder %s18, 0
      %p155 = por %p153, %p154
      %p156 = scmp.ne.s32.totalorder %s145, %s148
      %p157 = scmp.eq.s32.totalorder %s23, 2
      %p158 = por %p156, %p157
      %p159 = scmp.ne.s32.totalorder %s148, %s149
      %p160 = scmp.eq.s32.totalorder %s23, 0
      %p161 = por %p159, %p160
      %p162 = scmp.ne.s32.totalorder %s148, %s149
      %p163 = scmp.eq.s32.totalorder %s24, 2
      %p164 = por %p162, %p163
      %p166 = scmp.ne.s32.totalorder %s149, %s165
      %p167 = scmp.eq.s32.totalorder %s24, 0
      %p168 = por %p166, %p167
      %s170 = sadd.s32 %s169, 1
      %p173 = scmp.eq.s32.totalorder %s18, 2
      %p174 = scmp.ne.s32.totalorder %s169, %s171
      %p175 = scmp.eq.s32.totalorder %s18, 0
      %p176 = por %p174, %p175
      %p177 = scmp.ne.s32.totalorder %s169, %s171
      %p178 = scmp.eq.s32.totalorder %s23, 2
      %p179 = por %p177, %p178
      %p180 = scmp.ne.s32.totalorder %s171, %s172
      %p181 = scmp.eq.s32.totalorder %s23, 0
      %p182 = por %p180, %p181
      %p183 = scmp.ne.s32.totalorder %s171, %s172
      %p184 = scmp.eq.s32.totalorder %s24, 2
      %p185 = por %p183, %p184
      %p187 = scmp.ne.s32.totalorder %s172, %s186
      %p188 = scmp.eq.s32.totalorder %s24, 0
      %p189 = por %p187, %p188
      %s191 = sadd.s32 %s190, 1
      %p194 = scmp.eq.s32.totalorder %s18, 2
      %p195 = scmp.ne.s32.totalorder %s190, %s192
      %p196 = scmp.eq.s32.totalorder %s18, 0
      %p197 = por %p195, %p196
      %p198 = scmp.ne.s32.totalorder %s190, %s192
      %p199 = scmp.eq.s32.totalorder %s23, 2
      %p200 = por %p198, %p199
      %p201 = scmp.ne.s32.totalorder %s192, %s193
      %p202 = scmp.eq.s32.totalorder %s23, 0
      %p203 = por %p201, %p202
      %p204 = scmp.ne.s32.totalorder %s192, %s193
      %p205 = scmp.eq.s32.totalorder %s24, 2
      %p206 = por %p204, %p205
      %p208 = scmp.ne.s32.totalorder %s193, %s207
      %p209 = scmp.eq.s32.totalorder %s24, 0
      %p210 = por %p208, %p209
      %s211 = ssub.s32 %s25, %s44
      %p212 = scmp.eq.s32.totalorder %s211, 0
      %s214 = sadd.s32 %s213, 1
      %s215 = scalar_select %p212, %s213, %s214
      %p218 = pneg %p212
      %p219 = scmp.eq.s32.totalorder %s18, 2
      %p220 = por %p218, %p219
      %p221 = scmp.ne.s32.totalorder %s213, %s216
      %p222 = scmp.eq.s32.totalorder %s18, 0
      %p223 = por %p221, %p222
      %p224 = scmp.ne.s32.totalorder %s213, %s216
      %p225 = scmp.eq.s32.totalorder %s23, 2
      %p226 = por %p224, %p225
      %p227 = scmp.ne.s32.totalorder %s216, %s217
      %p228 = scmp.eq.s32.totalorder %s23, 0
      %p229 = por %p227, %p228
      %p230 = scmp.ne.s32.totalorder %s216, %s217
      %p231 = scmp.eq.s32.totalorder %s24, 2
      %p232 = por %p230, %p231
      %p234 = scmp.ne.s32.totalorder %s217, %s233
      %p235 = scmp.eq.s32.totalorder %s24, 0
      %p236 = por %p234, %p235
      %p237 = scmp.le.s32.totalorder 1, %s18
      %p238 = scmp.lt.s32.totalorder %s18, 4
      %p239 = pnand %p237, %p238
      %p240 = pneg %p239
      // Predicated region
      $region9: #{_forward_impl.1} parent=5 // pred_check
        _
      $region10: #{_forward_impl.1} parent=5 // pred_check_branch
        %242 = sbr.rel (%p239) target = $region12
      $region11: #{_forward_impl.1} parent=5 // pred_region
        %s243 = ssub.s32 %s18, 1
        // Predicated region
        $region13: #{_forward_impl.1} parent=11 // pred_check
          %p244 = pneg %p63
        $region14: #{_forward_impl.1} parent=11 // pred_check_branch
          %246 = sbr.rel (%p244) target = $region16
        $region15: #{_forward_impl.1} parent=11 // pred_region
          %s247 = smul.u32 2, %s28
          %p248 = scmp.lt.s32.totalorder %s247, 1
          %s249 = scalar_select %p248, %s247, 1
          %s250 = smul.addr %s249, 8
          %s251 = scalar_lea.vmem %s0, %s250
          %s252 = smul.u32 2, %s28
        $region16: #{_forward_impl.1} parent=11 // pred_fallthru
          _
        // Predicated region
        $region17: #{_forward_impl.1} parent=11 // pred_check
          %p253 = pneg %p84
        $region18: #{_forward_impl.1} parent=11 // pred_check_branch
          %255 = sbr.rel (%p253) target = $region20
        $region19: #{_forward_impl.1} parent=11 // pred_region
          %s257 = ssub.s32 2048, 2048
          %258 = vsyncadd [#allocation5], %s257
          %s259 = sshll.u32 [#allocation4], 4
          %s260 = int_to_ptr.vmem [resolvable:$true] %s259
          %265 = dma.hbm_to_vmem [thread:$0]  %s1, 2048, %s260, [#allocation5], 128, 128, 8
        $region20: #{_forward_impl.1} parent=11 // pred_fallthru
          _
        // Predicated region
        $region21: #{_forward_impl.1} parent=11 // pred_check
          %p266 = pneg %p105
        $region22: #{_forward_impl.1} parent=11 // pred_check_branch
          %268 = sbr.rel (%p266) target = $region24
        $region23: #{_forward_impl.1} parent=11 // pred_region
          _
        $region24: #{_forward_impl.1} parent=11 // pred_fallthru
          _
        // Predicated region
        $region25: #{_forward_impl.1} parent=11 // pred_check
          %p269 = pneg %p182
        $region26: #{_forward_impl.1} parent=11 // pred_check_branch
          %271 = sbr.rel (%p269) target = $region28
        $region27: #{_forward_impl.1} parent=11 // pred_region
          %s273 = ssub.s32 2048, 2048
          %274 = vsyncadd [#allocation8], %s273
          %s275 = sshll.u32 [#allocation9], 4
          %s276 = int_to_ptr.vmem [resolvable:$true] %s275
          %281 = dma.hbm_to_vmem [thread:$0]  %s5, 2048, %s276, [#allocation8], 128, 128, 8
        $region28: #{_forward_impl.1} parent=11 // pred_fallthru
          _
        // Predicated region
        $region29: #{_forward_impl.1} parent=11 // pred_check
          %p282 = pneg %p203
        $region30: #{_forward_impl.1} parent=11 // pred_check_branch
          %284 = sbr.rel (%p282) target = $region32
        $region31: #{_forward_impl.1} parent=11 // pred_region
          _
        $region32: #{_forward_impl.1} parent=11 // pred_fallthru
          _
      $region12: #{_forward_impl.1} parent=5 // pred_fallthru
        _
      %p285 = scmp.lt.s32.totalorder %s18, 3
      // Predicated region
      $region33: #{_forward_impl.1} parent=5 // pred_check
        %p286 = pneg %p285
      $region34: #{_forward_impl.1} parent=5 // pred_check_branch
        %288 = sbr.rel (%p286) target = $region36
      $region35: #{_forward_impl.1} parent=5 // pred_region
        // Predicated region
        $region37: #{_forward_impl.1} parent=35 // pred_check
          %p289 = pneg %p127
        $region38: #{_forward_impl.1} parent=35 // pred_check_branch
          %291 = sbr.rel (%p289) target = $region40
        $region39: #{_forward_impl.1} parent=35 // pred_region
          %s292 = sand.u32 %s18, 1
          %s293 = scalar_lea.sflag [#allocation8], %s292
          %s294 = sand.u32 %s117, 1
          %s295 = smul.addr %s294, 128
          %s296 = scalar_lea.vmem [#allocation7], %s295
          %s298 = ssub.s32 2048, 2048
          %299 = vsyncadd %s293, %s298
          %s300 = smul.addr %s26, 16
          %s301 = sadd.s32 %s27, %s300
          %s302 = smul.addr %s301, 128
          %s303 = scalar_lea.hbm %s3, %s302
          %s304 = sshll.u32 %s296, 4
          %s305 = int_to_ptr.vmem [resolvable:$true] %s304
          %310 = dma.hbm_to_vmem [thread:$0]  %s303, 2048, %s305, %s293, 128, 128, 8
        $region40: #{_forward_impl.1} parent=35 // pred_fallthru
          _
        // Predicated region
        $region41: #{_forward_impl.1} parent=35 // pred_check
          %p311 = pneg %p155
        $region42: #{_forward_impl.1} parent=35 // pred_check_branch
          %313 = sbr.rel (%p311) target = $region44
        $region43: #{_forward_impl.1} parent=35 // pred_region
          %p314 = scmp.lt.s32.totalorder %s26, 2
          %s315 = scalar_select %p314, %s26, 2
          %p316 = scmp.lt.s32.totalorder %s27, 0
          %s317 = scalar_select %p316, %s27, 0
          %s318 = sadd.s32 %s317, %s315
          %s319 = scalar_lea.vmem %s4, %s318
        $region44: #{_forward_impl.1} parent=35 // pred_fallthru
          _
      $region36: #{_forward_impl.1} parent=5 // pred_fallthru
        _
      %p320 = scmp.le.s32.totalorder 1, %s18
      %p321 = scmp.lt.s32.totalorder %s18, 4
      %p322 = pnand %p320, %p321
      %p323 = pneg %p322
      // Predicated region
      $region45: #{_forward_impl.1} parent=5 // pred_check
        _
      $region46: #{_forward_impl.1} parent=5 // pred_check_branch
        %325 = sbr.rel (%p322) target = $region48
      $region47: #{_forward_impl.1} parent=5 // pred_region
        %s326 = ssub.s32 %s18, 1
        // Predicated region
        $region49: #{_forward_impl.1} parent=47 // pred_check
          %p327 = pneg %p84
        $region50: #{_forward_impl.1} parent=47 // pred_check_branch
          %329 = sbr.rel (%p327) target = $region52
        $region51: #{_forward_impl.1} parent=47 // pred_region
          %330 = dma.done [#allocation5], 2048
        $region52: #{_forward_impl.1} parent=47 // pred_fallthru
          _
        %s331 = sand.u32 %s23, 1
        %s332 = scalar_lea.sflag [#allocation8], %s331
        %s333 = sand.u32 %s120, 1
        %s334 = smul.addr %s333, 128
        %s335 = scalar_lea.vmem [#allocation7], %s334
        // Predicated region
        $region53: #{_forward_impl.1} parent=47 // pred_check
          %p336 = pneg %p133
        $region54: #{_forward_impl.1} parent=47 // pred_check_branch
          %338 = sbr.rel (%p336) target = $region56
        $region55: #{_forward_impl.1} parent=47 // pred_region
          %339 = dma.done %s332, 2048
        $region56: #{_forward_impl.1} parent=47 // pred_fallthru
          _
        // Predicated region
        $region57: #{_forward_impl.1} parent=47 // pred_check
          %p340 = pneg %p182
        $region58: #{_forward_impl.1} parent=47 // pred_check_branch
          %342 = sbr.rel (%p340) target = $region60
        $region59: #{_forward_impl.1} parent=47 // pred_region
          %343 = dma.done [#allocation8], 2048
        $region60: #{_forward_impl.1} parent=47 // pred_fallthru
          _
        %s344 = smul.u32 2, %s28
        %p345 = scmp.lt.s32.totalorder %s344, 1
        %s346 = scalar_select %p345, %s344, 1
        %s347 = smul.addr %s346, 8
        %s348 = scalar_lea.vmem %s0, %s347
        %p349 = pneg %p63
        %p350 = pneg %p60
        %p351 = pneg %p84
        %p352 = pneg %p81
        %p353 = pneg %p105
        %p354 = pneg %p102
        %s355 = sand.u32 %s23, 1
        %s356 = scalar_lea.sflag [#allocation8], %s355
        %s357 = sand.u32 %s120, 1
        %s358 = smul.addr %s357, 128
        %s359 = scalar_lea.vmem [#allocation7], %s358
        %p360 = pneg %p133
        %p361 = pneg %p130
        %p362 = scmp.lt.s32.totalorder %s29, 2
        %s363 = scalar_select %p362, %s29, 2
        %p364 = scmp.lt.s32.totalorder %s30, 0
        %s365 = scalar_select %p364, %s30, 0
        %s366 = sadd.s32 %s365, %s363
        %s367 = scalar_lea.vmem %s4, %s366
        %p368 = pneg %p161
        %p369 = pneg %p158
        %p370 = pneg %p182
        %p371 = pneg %p179
        %p372 = pneg %p203
        %p373 = pneg %p200
        %p374 = pneg %p229
        %p375 = pneg %p226
        %s376 = smul.u32 2, %s28
        %p377 = scmp.lt.s32.totalorder %s376, 1
        %s378 = scalar_select %p377, %s376, 1
        %s379 = smul.addr %s378, 8
        %s380 = scalar_lea.vmem %s0, %s379
        %s381 = smul.u32 2, %s28
        %p382 = scmp.lt.s32.totalorder %s29, 2
        %s383 = scalar_select %p382, %s29, 2
        %p384 = scmp.lt.s32.totalorder %s30, 0
        %s385 = scalar_select %p384, %s30, 0
        %s386 = sadd.s32 %s385, %s383
        %s387 = scalar_lea.vmem %s4, %s386
        %s388 = smul.u32 2, %s28
        %p389 = scmp.eq.s32.totalorder %s29, 0
        %p390 = scmp.eq.s32.totalorder %s30, 0
        %p391 = pnand %p389, %p390
        %p392 = pneg %p391
        // Predicated region
        $region61: #{_forward_impl.1} parent=47 // pred_check
          _
        $region62: #{_forward_impl.1} parent=47 // pred_check_branch
          %394 = sbr.rel (%p391) target = $region64
        $region63: #{_forward_impl.1} parent=47 // pred_region
          %v395 = vld [vmem:[%s380] sm:$0xff]
          %v396 = vld [vmem:[%s380 + $0x8] sm:$0xff]
          %v397 = vld [vmem:[#allocation4] sm:$0xff]
          %v398 = vld [vmem:[#allocation4 + $0x8] sm:$0xff]
          %v399 = vld [vmem:[#allocation4 + $0x10] sm:$0xff]
          %v400 = vld [vmem:[#allocation4 + $0x18] sm:$0xff]
          %v401 = vld [vmem:[#allocation4 + $0x20] sm:$0xff]
          %v402 = vld [vmem:[#allocation4 + $0x28] sm:$0xff]
          %v403 = vld [vmem:[#allocation4 + $0x30] sm:$0xff]
          %v404 = vld [vmem:[#allocation4 + $0x38] sm:$0xff]
          %v405 = vld [vmem:[#allocation4 + $0x40] sm:$0xff]
          %v406 = vld [vmem:[#allocation4 + $0x48] sm:$0xff]
          %v407 = vld [vmem:[#allocation4 + $0x50] sm:$0xff]
          %v408 = vld [vmem:[#allocation4 + $0x58] sm:$0xff]
          %v409 = vld [vmem:[#allocation4 + $0x60] sm:$0xff]
          %v410 = vld [vmem:[#allocation4 + $0x68] sm:$0xff]
          %v411 = vld [vmem:[#allocation4 + $0x70] sm:$0xff]
          %v412 = vld [vmem:[#allocation4 + $0x78] sm:$0xff]
          %v413 = vld [vmem:[%s2] sm:$0x1]
          %v415 = vlaneseq
          %v416 = vshrl.u32 %v415, 7
          %v417 = vsub.s32 0, %v416
          %v418 = vrot.slane %v413, %v417
          %420 = vmatprep.subr.mxu0 0.0
          %421 = vmatpush1.msra.mxu0 %v412
          %422 = vmatprep.subr.mxu0 0.0
          %423 = vmatpush1.msra.mxu0 %v411
          %424 = vmatprep.subr.mxu0 0.0
          %425 = vmatpush1.msra.mxu0 %v410
          %426 = vmatprep.subr.mxu0 0.0
          %427 = vmatpush1.msra.mxu0 %v409
          %428 = vmatprep.subr.mxu0 0.0
          %429 = vmatpush1.msra.mxu0 %v408
          %430 = vmatprep.subr.mxu0 0.0
          %431 = vmatpush1.msra.mxu0 %v407
          %432 = vmatprep.subr.mxu0 0.0
          %433 = vmatpush1.msra.mxu0 %v406
          %434 = vmatprep.subr.mxu0 0.0
          %435 = vmatpush1.msra.mxu0 %v405
          %436 = vmatprep.subr.mxu0 0.0
          %437 = vmatpush1.msra.mxu0 %v404
          %438 = vmatprep.subr.mxu0 0.0
          %439 = vmatpush1.msra.mxu0 %v403
          %440 = vmatprep.subr.mxu0 0.0
          %441 = vmatpush1.msra.mxu0 %v402
          %442 = vmatprep.subr.mxu0 0.0
          %443 = vmatpush1.msra.mxu0 %v401
          %444 = vmatprep.subr.mxu0 0.0
          %445 = vmatpush1.msra.mxu0 %v400
          %446 = vmatprep.subr.mxu0 0.0
          %447 = vmatpush1.msra.mxu0 %v399
          %448 = vmatprep.subr.mxu0 0.0
          %449 = vmatpush1.msra.mxu0 %v398
          %450 = vmatprep.subr.mxu0 0.0
          %451 = vmatpush1.msra.mxu0 %v397
          %452 = vmatprep.subr.mxu0 0.0
          %453 = vmatpush2.msra.mxu0 0.0
          %454 = vmatprep.subr.mxu0 0.0
          %455 = vmatpush2.msra.mxu0 0.0
          %456 = vmatprep.subr.mxu0 0.0
          %457 = vmatpush2.msra.mxu0 0.0
          %458 = vmatprep.subr.mxu0 0.0
          %459 = vmatpush2.msra.mxu0 0.0
          %460 = vmatprep.subr.mxu0 0.0
          %461 = vmatpush2.msra.mxu0 0.0
          %462 = vmatprep.subr.mxu0 0.0
          %463 = vmatpush2.msra.mxu0 0.0
          %464 = vmatprep.subr.mxu0 0.0
          %465 = vmatpush2.msra.mxu0 0.0
          %466 = vmatprep.subr.mxu0 0.0
          %467 = vmatpush2.msra.mxu0 0.0
          %468 = vmatprep.subr.mxu0 0.0
          %469 = vmatpush2.msra.mxu0 0.0
          %470 = vmatprep.subr.mxu0 0.0
          %471 = vmatpush2.msra.mxu0 0.0
          %472 = vmatprep.subr.mxu0 0.0
          %473 = vmatpush2.msra.mxu0 0.0
          %474 = vmatprep.subr.mxu0 0.0
          %475 = vmatpush2.msra.mxu0 0.0
          %476 = vmatprep.subr.mxu0 0.0
          %477 = vmatpush2.msra.mxu0 0.0
          %478 = vmatprep.subr.mxu0 0.0
          %479 = vmatpush2.msra.mxu0 0.0
          %480 = vmatprep.subr.mxu0 0.0
          %481 = vmatpush2.msra.mxu0 0.0
          %482 = vmatprep.subr.mxu0 0.0
          %483 = vmatpush2.msra.mxu0 0.0
          %484 = vmatprep.mubr.f32.mxu0 0.0
          %485 = vmatmul.mubr.f32.gmra.mxu0 %v395
          %v486 = vpop.f32.mrf.mxu0
          %v487 = vadd.f32 %v418, %v486
          %v488 = vpop.f32.mrf.mxu0
          %489 = vmatprep.mubr.f32.mxu0 0.0
          %490 = vmatmul.mubr.f32.gmra.mxu0 %v396
          %v491 = vpop.f32.mrf.mxu0
          %v492 = vadd.f32 %v418, %v491
          %v493 = vpop.f32.mrf.mxu0
          %494 = vdwg.mxu0
          %495 = vst [vmem:[#allocation2] sm:$0xff] %v487
          %496 = vst [vmem:[#allocation2 + $0x8] sm:$0xff] %v492
        $region64: #{_forward_impl.1} parent=47 // pred_fallthru
          _
        %v497 = vld [vmem:[#allocation2] sm:$0xff]
        %v498 = vld [vmem:[#allocation2 + $0x8] sm:$0xff]
        %v499 = vld [vmem:[%s335] sm:$0xff]
        %v500 = vld [vmem:[%s335 + $0x8] sm:$0xff]
        %v501 = vld [vmem:[%s335 + $0x10] sm:$0xff]
        %v502 = vld [vmem:[%s335 + $0x18] sm:$0xff]
        %v503 = vld [vmem:[%s335 + $0x20] sm:$0xff]
        %v504 = vld [vmem:[%s335 + $0x28] sm:$0xff]
        %v505 = vld [vmem:[%s335 + $0x30] sm:$0xff]
        %v506 = vld [vmem:[%s335 + $0x38] sm:$0xff]
        %v507 = vld [vmem:[%s335 + $0x40] sm:$0xff]
        %v508 = vld [vmem:[%s335 + $0x48] sm:$0xff]
        %v509 = vld [vmem:[%s335 + $0x50] sm:$0xff]
        %v510 = vld [vmem:[%s335 + $0x58] sm:$0xff]
        %v511 = vld [vmem:[%s335 + $0x60] sm:$0xff]
        %v512 = vld [vmem:[%s335 + $0x68] sm:$0xff]
        %v513 = vld [vmem:[%s335 + $0x70] sm:$0xff]
        %v514 = vld [vmem:[%s335 + $0x78] sm:$0xff]
        %v515 = vld [vmem:[%s387] sm:$0x1]
        %v517 = vlaneseq
        %v518 = vshrl.u32 %v517, 7
        %v519 = vsub.s32 0, %v518
        %v520 = vrot.slane %v515, %v519
        %522 = vmatprep.subr.mxu0 0.0
        %523 = vmatpush1.msra.mxu0 %v514
        %524 = vmatprep.subr.mxu0 0.0
        %525 = vmatpush1.msra.mxu0 %v513
        %526 = vmatprep.subr.mxu0 0.0
        %527 = vmatpush1.msra.mxu0 %v512
        %528 = vmatprep.subr.mxu0 0.0
        %529 = vmatpush1.msra.mxu0 %v511
        %530 = vmatprep.subr.mxu0 0.0
        %531 = vmatpush1.msra.mxu0 %v510
        %532 = vmatprep.subr.mxu0 0.0
        %533 = vmatpush1.msra.mxu0 %v509
        %534 = vmatprep.subr.mxu0 0.0
        %535 = vmatpush1.msra.mxu0 %v508
        %536 = vmatprep.subr.mxu0 0.0
        %537 = vmatpush1.msra.mxu0 %v507
        %538 = vmatprep.subr.mxu0 0.0
        %539 = vmatpush1.msra.mxu0 %v506
        %540 = vmatprep.subr.mxu0 0.0
        %541 = vmatpush1.msra.mxu0 %v505
        %542 = vmatprep.subr.mxu0 0.0
        %543 = vmatpush1.msra.mxu0 %v504
        %544 = vmatprep.subr.mxu0 0.0
        %545 = vmatpush1.msra.mxu0 %v503
        %546 = vmatprep.subr.mxu0 0.0
        %547 = vmatpush1.msra.mxu0 %v502
        %548 = vmatprep.subr.mxu0 0.0
        %549 = vmatpush1.msra.mxu0 %v501
        %550 = vmatprep.subr.mxu0 0.0
        %551 = vmatpush1.msra.mxu0 %v500
        %552 = vmatprep.subr.mxu0 0.0
        %553 = vmatpush1.msra.mxu0 %v499
        %554 = vmatprep.subr.mxu0 0.0
        %555 = vmatpush2.msra.mxu0 0.0
        %556 = vmatprep.subr.mxu0 0.0
        %557 = vmatpush2.msra.mxu0 0.0
        %558 = vmatprep.subr.mxu0 0.0
        %559 = vmatpush2.msra.mxu0 0.0
        %560 = vmatprep.subr.mxu0 0.0
        %561 = vmatpush2.msra.mxu0 0.0
        %562 = vmatprep.subr.mxu0 0.0
        %563 = vmatpush2.msra.mxu0 0.0
        %564 = vmatprep.subr.mxu0 0.0
        %565 = vmatpush2.msra.mxu0 0.0
        %566 = vmatprep.subr.mxu0 0.0
        %567 = vmatpush2.msra.mxu0 0.0
        %568 = vmatprep.subr.mxu0 0.0
        %569 = vmatpush2.msra.mxu0 0.0
        %570 = vmatprep.subr.mxu0 0.0
        %571 = vmatpush2.msra.mxu0 0.0
        %572 = vmatprep.subr.mxu0 0.0
        %573 = vmatpush2.msra.mxu0 0.0
        %574 = vmatprep.subr.mxu0 0.0
        %575 = vmatpush2.msra.mxu0 0.0
        %576 = vmatprep.subr.mxu0 0.0
        %577 = vmatpush2.msra.mxu0 0.0
        %578 = vmatprep.subr.mxu0 0.0
        %579 = vmatpush2.msra.mxu0 0.0
        %580 = vmatprep.subr.mxu0 0.0
        %581 = vmatpush2.msra.mxu0 0.0
        %582 = vmatprep.subr.mxu0 0.0
        %583 = vmatpush2.msra.mxu0 0.0
        %584 = vmatprep.subr.mxu0 0.0
        %585 = vmatpush2.msra.mxu0 0.0
        %586 = vmatprep.mubr.f32.mxu0 0.0
        %587 = vmatmul.mubr.f32.gmra.mxu0 %v497
        %v588 = vpop.f32.mrf.mxu0
        %v589 = vadd.f32 %v520, %v588
        %v590 = vpop.f32.mrf.mxu0
        %591 = vmatprep.mubr.f32.mxu0 0.0
        %592 = vmatmul.mubr.f32.gmra.mxu0 %v498
        %v593 = vpop.f32.mrf.mxu0
        %v594 = vadd.f32 %v520, %v593
        %v595 = vpop.f32.mrf.mxu0
        %596 = vdwg.mxu0
        %v597 = vmax.f32 %v589, 0.0
        %v598 = vmax.f32 %v594, 0.0
        %599 = vst [vmem:[#allocation3] sm:$0xff] %v597
        %600 = vst [vmem:[#allocation3 + $0x8] sm:$0xff] %v598
        // Predicated region
        $region65: #{_forward_impl.1} parent=47 // pred_check
          %p601 = pneg %p390
        $region66: #{_forward_impl.1} parent=47 // pred_check_branch
          %603 = sbr.rel (%p601) target = $region68
        $region67: #{_forward_impl.1} parent=47 // pred_region
          %v604 = vld [vmem:[#allocation3] sm:$0xff]
          %v605 = vld [vmem:[#allocation3 + $0x8] sm:$0xff]
          %606 = vst [vmem:[#allocation2] sm:$0xff] %v604
          %607 = vst [vmem:[#allocation2 + $0x8] sm:$0xff] %v605
        $region68: #{_forward_impl.1} parent=47 // pred_fallthru
          _
        %p608 = scmp.eq.s32.totalorder %s29, 2
        %p609 = pnand %p608, %p390
        %p610 = pneg %p609
        // Predicated region
        $region69: #{_forward_impl.1} parent=47 // pred_check
          _
        $region70: #{_forward_impl.1} parent=47 // pred_check_branch
          %612 = sbr.rel (%p609) target = $region72
        $region71: #{_forward_impl.1} parent=47 // pred_region
          %v613 = vld [vmem:[#allocation2] sm:$0xff]
          %v614 = vld [vmem:[#allocation2 + $0x8] sm:$0xff]
          %v615 = vld [vmem:[#allocation9] sm:$0xff]
          %v616 = vld [vmem:[#allocation9 + $0x8] sm:$0xff]
          %v617 = vld [vmem:[#allocation9 + $0x10] sm:$0xff]
          %v618 = vld [vmem:[#allocation9 + $0x18] sm:$0xff]
          %v619 = vld [vmem:[#allocation9 + $0x20] sm:$0xff]
          %v620 = vld [vmem:[#allocation9 + $0x28] sm:$0xff]
          %v621 = vld [vmem:[#allocation9 + $0x30] sm:$0xff]
          %v622 = vld [vmem:[#allocation9 + $0x38] sm:$0xff]
          %v623 = vld [vmem:[#allocation9 + $0x40] sm:$0xff]
          %v624 = vld [vmem:[#allocation9 + $0x48] sm:$0xff]
          %v625 = vld [vmem:[#allocation9 + $0x50] sm:$0xff]
          %v626 = vld [vmem:[#allocation9 + $0x58] sm:$0xff]
          %v627 = vld [vmem:[#allocation9 + $0x60] sm:$0xff]
          %v628 = vld [vmem:[#allocation9 + $0x68] sm:$0xff]
          %v629 = vld [vmem:[#allocation9 + $0x70] sm:$0xff]
          %v630 = vld [vmem:[#allocation9 + $0x78] sm:$0xff]
          %v631 = vld [vmem:[%s6] sm:$0x1]
          %v633 = vlaneseq
          %v634 = vshrl.u32 %v633, 7
          %v635 = vsub.s32 0, %v634
          %v636 = vrot.slane %v631, %v635
          %638 = vmatprep.subr.mxu0 0.0
          %639 = vmatpush1.msra.mxu0 %v630
          %640 = vmatprep.subr.mxu0 0.0
          %641 = vmatpush1.msra.mxu0 %v629
          %642 = vmatprep.subr.mxu0 0.0
          %643 = vmatpush1.msra.mxu0 %v628
          %644 = vmatprep.subr.mxu0 0.0
          %645 = vmatpush1.msra.mxu0 %v627
          %646 = vmatprep.subr.mxu0 0.0
          %647 = vmatpush1.msra.mxu0 %v626
          %648 = vmatprep.subr.mxu0 0.0
          %649 = vmatpush1.msra.mxu0 %v625
          %650 = vmatprep.subr.mxu0 0.0
          %651 = vmatpush1.msra.mxu0 %v624
          %652 = vmatprep.subr.mxu0 0.0
          %653 = vmatpush1.msra.mxu0 %v623
          %654 = vmatprep.subr.mxu0 0.0
          %655 = vmatpush1.msra.mxu0 %v622
          %656 = vmatprep.subr.mxu0 0.0
          %657 = vmatpush1.msra.mxu0 %v621
          %658 = vmatprep.subr.mxu0 0.0
          %659 = vmatpush1.msra.mxu0 %v620
          %660 = vmatprep.subr.mxu0 0.0
          %661 = vmatpush1.msra.mxu0 %v619
          %662 = vmatprep.subr.mxu0 0.0
          %663 = vmatpush1.msra.mxu0 %v618
          %664 = vmatprep.subr.mxu0 0.0
          %665 = vmatpush1.msra.mxu0 %v617
          %666 = vmatprep.subr.mxu0 0.0
          %667 = vmatpush1.msra.mxu0 %v616
          %668 = vmatprep.subr.mxu0 0.0
          %669 = vmatpush1.msra.mxu0 %v615
          %670 = vmatprep.subr.mxu0 0.0
          %671 = vmatpush2.msra.mxu0 0.0
          %672 = vmatprep.subr.mxu0 0.0
          %673 = vmatpush2.msra.mxu0 0.0
          %674 = vmatprep.subr.mxu0 0.0
          %675 = vmatpush2.msra.mxu0 0.0
          %676 = vmatprep.subr.mxu0 0.0
          %677 = vmatpush2.msra.mxu0 0.0
          %678 = vmatprep.subr.mxu0 0.0
          %679 = vmatpush2.msra.mxu0 0.0
          %680 = vmatprep.subr.mxu0 0.0
          %681 = vmatpush2.msra.mxu0 0.0
          %682 = vmatprep.subr.mxu0 0.0
          %683 = vmatpush2.msra.mxu0 0.0
          %684 = vmatprep.subr.mxu0 0.0
          %685 = vmatpush2.msra.mxu0 0.0
          %686 = vmatprep.subr.mxu0 0.0
          %687 = vmatpush2.msra.mxu0 0.0
          %688 = vmatprep.subr.mxu0 0.0
          %689 = vmatpush2.msra.mxu0 0.0
          %690 = vmatprep.subr.mxu0 0.0
          %691 = vmatpush2.msra.mxu0 0.0
          %692 = vmatprep.subr.mxu0 0.0
          %693 = vmatpush2.msra.mxu0 0.0
          %694 = vmatprep.subr.mxu0 0.0
          %695 = vmatpush2.msra.mxu0 0.0
          %696 = vmatprep.subr.mxu0 0.0
          %697 = vmatpush2.msra.mxu0 0.0
          %698 = vmatprep.subr.mxu0 0.0
          %699 = vmatpush2.msra.mxu0 0.0
          %700 = vmatprep.subr.mxu0 0.0
          %701 = vmatpush2.msra.mxu0 0.0
          %702 = vmatprep.mubr.f32.mxu0 0.0
          %703 = vmatmul.mubr.f32.gmra.mxu0 %v613
          %v704 = vpop.f32.mrf.mxu0
          %v705 = vadd.f32 %v636, %v704
          %v706 = vpop.f32.mrf.mxu0
          %707 = vmatprep.mubr.f32.mxu0 0.0
          %708 = vmatmul.mubr.f32.gmra.mxu0 %v614
          %v709 = vpop.f32.mrf.mxu0
          %v710 = vadd.f32 %v636, %v709
          %v711 = vpop.f32.mrf.mxu0
          %712 = vdwg.mxu0
          %713 = vst [vmem:[#allocation10] sm:$0xff] %v705
          %714 = vst [vmem:[#allocation10 + $0x8] sm:$0xff] %v710
        $region72: #{_forward_impl.1} parent=47 // pred_fallthru
          _
        // Predicated region
        $region73: #{_forward_impl.1} parent=47 // pred_check
          %p715 = pneg %p226
        $region74: #{_forward_impl.1} parent=47 // pred_check_branch
          %717 = sbr.rel (%p715) target = $region76
        $region75: #{_forward_impl.1} parent=47 // pred_region
          %s718 = smul.u32 2, %s28
          %s720 = ssub.s32 256, 256
          %721 = vsyncadd [#allocation6], %s720
          %s722 = smul.addr %s718, 128
          %s723 = scalar_lea.hbm %s7, %s722
          %s724 = sshll.u32 [#allocation10], 4
          %s725 = int_to_ptr.vmem [resolvable:$true] %s724
          %730 = dma.vmem_to_hbm [thread:$0]  %s725, 256, %s723, [#allocation6], 128, 128, 8
        $region76: #{_forward_impl.1} parent=47 // pred_fallthru
          _
        // Predicated region
        $region77: #{_forward_impl.1} parent=47 // pred_check
          %p731 = pneg %p226
        $region78: #{_forward_impl.1} parent=47 // pred_check_branch
          %733 = sbr.rel (%p731) target = $region80
        $region79: #{_forward_impl.1} parent=47 // pred_region
          %734 = dma.done [#allocation6], 256
        $region80: #{_forward_impl.1} parent=47 // pred_fallthru
          _
      $region48: #{_forward_impl.1} parent=5 // pred_fallthru
        _
      %p735 = scmp.le.s32.totalorder 2, %s18
      // Predicated region
      $region81: #{_forward_impl.1} parent=5 // pred_check
        %p736 = pneg %p735
      $region82: #{_forward_impl.1} parent=5 // pred_check_branch
        %738 = sbr.rel (%p736) target = $region84
      $region83: #{_forward_impl.1} parent=5 // pred_region
        %s739 = ssub.s32 %s18, 2
      $region84: #{_forward_impl.1} parent=5 // pred_fallthru
        _
    $region6: #{_forward_impl.1} parent=1 // loop_footer
      %s22 = sadd.s32 1, %s18
    $region7: #{_forward_impl.1} parent=1 // loop_footer_branch
      %17 = sbr.rel target = $region3
    $region8: #{_forward_impl.1} parent=1 // loop_exit
      _
    %740 = vsyncpa [#allocation5], 1
    %s741 = scalar_lea.sflag [#allocation5], 1
    %742 = vsyncpa %s741, 1
    %743 = vsyncpa [#allocation8], 1
    %s744 = scalar_lea.sflag [#allocation8], 1
    %745 = vsyncpa %s744, 1
    %746 = vsyncpa [#allocation6], 1
    %s747 = scalar_lea.sflag [#allocation6], 1
    %748 = vsyncpa %s747, 1

// kernel: _forward_impl.1
$region0: #{_forward_impl.1}
  #allocation0 [shape = 'u32[]', space=smem, size = 0x4, offset = 0x4, fixed_abs, tag = 'smem constant byte address 0x4 - core index']
  #allocation1 [shape = 'u32[144,128]{1,0:T(1,128)}', space=vmem, size = 0x12000, scoped, tag = 'internal scratch']
  #allocation2 [shape = 'f32[16,128]{1,0:T(8,128)}', space=vmem, size = 0x2000, scoped, tag = 'scratch operand']
  #allocation3 [shape = 'f32[16,128]{1,0:T(8,128)}', space=vmem, size = 0x2000, scoped, tag = 'scratch operand']
  %s0 = inlined_call_operand.vmem [shape: f32[16,128], index: 0, kind: input, shape index: {}]
  %s1 = inlined_call_operand.hbm [shape: f32[128,128], index: 1, kind: input, shape index: {}]
  %s2 = inlined_call_operand.vmem [shape: f32[1,128], index: 2, kind: input, shape index: {}]
  %s3 = inlined_call_operand.hbm [shape: f32[3,128,128], index: 3, kind: input, shape index: {}]
  %s4 = inlined_call_operand.vmem [shape: f32[3,1,128], index: 4, kind: input, shape index: {}]
  %s5 = inlined_call_operand.hbm [shape: f32[128,128], index: 5, kind: input, shape index: {}]
  %s6 = inlined_call_operand.vmem [shape: f32[1,128], index: 6, kind: input, shape index: {}]
  %s7 = inlined_call_operand.hbm [shape: f32[16,128], index: 7, kind: output, shape index: {}]
  %s8 = sld [smem:[#allocation0]]
  $region85: #{_forward_impl.1} parent=0
    _
  %s10 = ssub.s32 1, %s8
  %s11 = scalar_select 0, %s10, %s8
  $region1: #{_forward_impl.1} parent=0
    #allocation4 [shape = 'u8[65536]{0}', space=vmem, size = 0x10000, scoped, tag = 'input window, operand 1, single buffered']
    #allocation5 [shape = 's32[2]{0}', space=sflag, size = 0x8, scoped, tag = 'scoped memory for _forward_impl.1']
    #allocation6 [shape = 's32[2]{0}', space=sflag, size = 0x8, scoped, tag = 'scoped memory for _forward_impl.1']
    #allocation7 [shape = 'u8[131072]{0}', space=vmem, size = 0x20000, scoped, tag = 'input window, operand 3']
    #allocation8 [shape = 's32[2]{0}', space=sflag, size = 0x8, scoped, tag = 'scoped memory for _forward_impl.1']
    #allocation9 [shape = 'u8[65536]{0}', space=vmem, size = 0x10000, scoped, tag = 'input window, operand 5, single buffered']
    #allocation10 [shape = 'u8[8192]{0}', space=vmem, size = 0x2000, scoped, tag = 'output window, operand 0, single buffered']
    %12 = vsyncpa [#allocation5], 0
    %13 = vsyncpa [#allocation8], 0
    %s14 = scalar_lea.sflag [#allocation8], 1
    %15 = vsyncpa %s14, 0
    %16 = vsyncpa [#allocation6], 0
    loop: start=0, step=1, limit=5
    $region2: #{_forward_impl.1} parent=1 // loop_pre_header
      _
    $region3: #{_forward_impl.1} parent=1 // loop_header
      %s18 = sphi 0, %s22
      %p19 = scmp.ge.s32.totalorder %s18, 5
      %s25 = sphi 0, %s44
      %s26 = sphi 0, %s40
      %s27 = sphi 0, %s36
      %s28 = sphi 0, %s25
      %s29 = sphi 0, %s26
      %s30 = sphi 0, %s27
      %s31 = sphi 0, %s28
      %s32 = sphi 0, %s29
      %s33 = sphi 0, %s30
      %s47 = sphi 0, %s49
      %s50 = sphi 0, %s47
      %s51 = sphi 0, %s50
      %s67 = sphi 0, %s51
      %s71 = sphi 0, %s71
      %s73 = sphi 0, %s71
      %s74 = sphi 0, %s73
      %s88 = sphi 0, %s74
      %s92 = sphi 0, %s92
      %s94 = sphi 0, %s92
      %s95 = sphi 0, %s94
      %s109 = sphi 0, %s95
      %s117 = sphi 0, %s119
      %s120 = sphi 0, %s117
      %s121 = sphi 0, %s120
      %s137 = sphi 0, %s121
      %s145 = sphi 0, %s147
      %s148 = sphi 0, %s145
      %s149 = sphi 0, %s148
      %s165 = sphi 0, %s149
      %s169 = sphi 0, %s169
      %s171 = sphi 0, %s169
      %s172 = sphi 0, %s171
      %s186 = sphi 0, %s172
      %s190 = sphi 0, %s190
      %s192 = sphi 0, %s190
      %s193 = sphi 0, %s192
      %s207 = sphi 0, %s193
      %s213 = sphi 0, %s215
      %s216 = sphi 0, %s213
      %s217 = sphi 0, %s216
      %s233 = sphi 0, %s217
    $region4: #{_forward_impl.1} parent=1 // loop_header_branch
      %21 = sbr.rel (%p19) target = $region8
    $region5: #{_forward_impl.1} parent=1 // loop_body
      %s23 = ssub.s32 %s18, 1
      %s24 = ssub.s32 %s18, 2
      %s34 = sadd.s32 1, %s27
      %p35 = scmp.ge.s32.totalorder %s34, 1
      %s36 = scalar_select %p35, 0, %s34
      %s37 = sadd.s32 1, %s26
      %s38 = scalar_select %p35, %s37, %s26
      %p39 = scmp.ge.s32.totalorder %s38, 3
      %s40 = scalar_select %p39, 0, %s38
      %s41 = sadd.s32 1, %s25
      %s42 = scalar_select %p39, %s41, %s25
      %p43 = scmp.ge.s32.totalorder %s42, 1
      %s44 = scalar_select %p43, 0, %s42
      %s45 = ssub.s32 %s25, %s44
      %p46 = scmp.eq.s32.totalorder %s45, 0
      %s48 = sadd.s32 %s47, 1
      %s49 = scalar_select %p46, %s47, %s48
      %p52 = pneg %p46
      %p53 = scmp.eq.s32.totalorder %s18, 2
      %p54 = por %p52, %p53
      %p55 = scmp.ne.s32.totalorder %s47, %s50
      %p56 = scmp.eq.s32.totalorder %s18, 0
      %p57 = por %p55, %p56
      %p58 = scmp.ne.s32.totalorder %s47, %s50
      %p59 = scmp.eq.s32.totalorder %s23, 2
      %p60 = por %p58, %p59
      %p61 = scmp.ne.s32.totalorder %s50, %s51
      %p62 = scmp.eq.s32.totalorder %s23, 0
      %p63 = por %p61, %p62
      %p64 = scmp.ne.s32.totalorder %s50, %s51
      %p65 = scmp.eq.s32.totalorder %s24, 2
      %p66 = por %p64, %p65
      %p68 = scmp.ne.s32.totalorder %s51, %s67
      %p69 = scmp.eq.s32.totalorder %s24, 0
      %p70 = por %p68, %p69
      %s72 = sadd.s32 %s71, 1
      %p75 = scmp.eq.s32.totalorder %s18, 2
      %p76 = scmp.ne.s32.totalorder %s71, %s73
      %p77 = scmp.eq.s32.totalorder %s18, 0
      %p78 = por %p76, %p77
      %p79 = scmp.ne.s32.totalorder %s71, %s73
      %p80 = scmp.eq.s32.totalorder %s23, 2
      %p81 = por %p79, %p80
      %p82 = scmp.ne.s32.totalorder %s73, %s74
      %p83 = scmp.eq.s32.totalorder %s23, 0
      %p84 = por %p82, %p83
      %p85 = scmp.ne.s32.totalorder %s73, %s74
      %p86 = scmp.eq.s32.totalorder %s24, 2
      %p87 = por %p85, %p86
      %p89 = scmp.ne.s32.totalorder %s74, %s88
      %p90 = scmp.eq.s32.totalorder %s24, 0
      %p91 = por %p89, %p90
      %s93 = sadd.s32 %s92, 1
      %p96 = scmp.eq.s32.totalorder %s18, 2
      %p97 = scmp.ne.s32.totalorder %s92, %s94
      %p98 = scmp.eq.s32.totalorder %s18, 0
      %p99 = por %p97, %p98
      %p100 = scmp.ne.s32.totalorder %s92, %s94
      %p101 = scmp.eq.s32.totalorder %s23, 2
      %p102 = por %p100, %p101
      %p103 = scmp.ne.s32.totalorder %s94, %s95
      %p104 = scmp.eq.s32.totalorder %s23, 0
      %p105 = por %p103, %p104
      %p106 = scmp.ne.s32.totalorder %s94, %s95
      %p107 = scmp.eq.s32.totalorder %s24, 2
      %p108 = por %p106, %p107
      %p110 = scmp.ne.s32.totalorder %s95, %s109
      %p111 = scmp.eq.s32.totalorder %s24, 0
      %p112 = por %p110, %p111
      %s113 = ssub.s32 %s26, %s40
      %s114 = ssub.s32 %s27, %s36
      %s115 = sor.u32 %s113, %s114
      %p116 = scmp.eq.s32.totalorder %s115, 0
      %s118 = sadd.s32 %s117, 1
      %s119 = scalar_select %p116, %s117, %s118
      %p122 = pneg %p116
      %p123 = scmp.eq.s32.totalorder %s18, 2
      %p124 = por %p122, %p123
      %p125 = scmp.ne.s32.totalorder %s117, %s120
      %p126 = scmp.eq.s32.totalorder %s18, 0
      %p127 = por %p125, %p126
      %p128 = scmp.ne.s32.totalorder %s117, %s120
      %p129 = scmp.eq.s32.totalorder %s23, 2
      %p130 = por %p128, %p129
      %p131 = scmp.ne.s32.totalorder %s120, %s121
      %p132 = scmp.eq.s32.totalorder %s23, 0
      %p133 = por %p131, %p132
      %p134 = scmp.ne.s32.totalorder %s120, %s121
      %p135 = scmp.eq.s32.totalorder %s24, 2
      %p136 = por %p134, %p135
      %p138 = scmp.ne.s32.totalorder %s121, %s137
      %p139 = scmp.eq.s32.totalorder %s24, 0
      %p140 = por %p138, %p139
      %s141 = ssub.s32 %s26, %s40
      %s142 = ssub.s32 %s27, %s36
      %s143 = sor.u32 %s141, %s142
      %p144 = scmp.eq.s32.totalorder %s143, 0
      %s146 = sadd.s32 %s145, 1
      %s147 = scalar_select %p144, %s145, %s146
      %p150 = pneg %p144
      %p151 = scmp.eq.s32.totalorder %s18, 2
      %p152 = por %p150, %p151
      %p153 = scmp.ne.s32.totalorder %s145, %s148
      %p154 = scmp.eq.s32.totalorder %s18, 0
      %p155 = por %p153, %p154
      %p156 = scmp.ne.s32.totalorder %s145, %s148
      %p157 = scmp.eq.s32.totalorder %s23, 2
      %p158 = por %p156, %p157
      %p159 = scmp.ne.s32.totalorder %s148, %s149
      %p160 = scmp.eq.s32.totalorder %s23, 0
      %p161 = por %p159, %p160
      %p162 = scmp.ne.s32.totalorder %s148, %s149
      %p163 = scmp.eq.s32.totalorder %s24, 2
      %p164 = por %p162, %p163
      %p166 = scmp.ne.s32.totalorder %s149, %s165
      %p167 = scmp.eq.s32.totalorder %s24, 0
      %p168 = por %p166, %p167
      %s170 = sadd.s32 %s169, 1
      %p173 = scmp.eq.s32.totalorder %s18, 2
      %p174 = scmp.ne.s32.totalorder %s169, %s171
      %p175 = scmp.eq.s32.totalorder %s18, 0
      %p176 = por %p174, %p175
      %p177 = scmp.ne.s32.totalorder %s169, %s171
      %p178 = scmp.eq.s32.totalorder %s23, 2
      %p179 = por %p177, %p178
      %p180 = scmp.ne.s32.totalorder %s171, %s172
      %p181 = scmp.eq.s32.totalorder %s23, 0
      %p182 = por %p180, %p181
      %p183 = scmp.ne.s32.totalorder %s171, %s172
      %p184 = scmp.eq.s32.totalorder %s24, 2
      %p185 = por %p183, %p184
      %p187 = scmp.ne.s32.totalorder %s172, %s186
      %p188 = scmp.eq.s32.totalorder %s24, 0
      %p189 = por %p187, %p188
      %s191 = sadd.s32 %s190, 1
      %p194 = scmp.eq.s32.totalorder %s18, 2
      %p195 = scmp.ne.s32.totalorder %s190, %s192
      %p196 = scmp.eq.s32.totalorder %s18, 0
      %p197 = por %p195, %p196
      %p198 = scmp.ne.s32.totalorder %s190, %s192
      %p199 = scmp.eq.s32.totalorder %s23, 2
      %p200 = por %p198, %p199
      %p201 = scmp.ne.s32.totalorder %s192, %s193
      %p202 = scmp.eq.s32.totalorder %s23, 0
      %p203 = por %p201, %p202
      %p204 = scmp.ne.s32.totalorder %s192, %s193
      %p205 = scmp.eq.s32.totalorder %s24, 2
      %p206 = por %p204, %p205
      %p208 = scmp.ne.s32.totalorder %s193, %s207
      %p209 = scmp.eq.s32.totalorder %s24, 0
      %p210 = por %p208, %p209
      %s211 = ssub.s32 %s25, %s44
      %p212 = scmp.eq.s32.totalorder %s211, 0
      %s214 = sadd.s32 %s213, 1
      %s215 = scalar_select %p212, %s213, %s214
      %p218 = pneg %p212
      %p219 = scmp.eq.s32.totalorder %s18, 2
      %p220 = por %p218, %p219
      %p221 = scmp.ne.s32.totalorder %s213, %s216
      %p222 = scmp.eq.s32.totalorder %s18, 0
      %p223 = por %p221, %p222
      %p224 = scmp.ne.s32.totalorder %s213, %s216
      %p225 = scmp.eq.s32.totalorder %s23, 2
      %p226 = por %p224, %p225
      %p227 = scmp.ne.s32.totalorder %s216, %s217
      %p228 = scmp.eq.s32.totalorder %s23, 0
      %p229 = por %p227, %p228
      %p230 = scmp.ne.s32.totalorder %s216, %s217
      %p231 = scmp.eq.s32.totalorder %s24, 2
      %p232 = por %p230, %p231
      %p234 = scmp.ne.s32.totalorder %s217, %s233
      %p235 = scmp.eq.s32.totalorder %s24, 0
      %p236 = por %p234, %p235
      %p237 = scmp.le.s32.totalorder 1, %s18
      %p238 = scmp.lt.s32.totalorder %s18, 4
      %p239 = pnand %p237, %p238
      %p240 = pneg %p239
      // Predicated region
      $region9: #{_forward_impl.1} parent=5 // pred_check
        _
      $region10: #{_forward_impl.1} parent=5 // pred_check_branch
        %242 = sbr.rel (%p239) target = $region12
      $region11: #{_forward_impl.1} parent=5 // pred_region
        %s243 = ssub.s32 %s18, 1
        // Predicated region
        $region13: #{_forward_impl.1} parent=11 // pred_check
          %p244 = pneg %p63
        $region14: #{_forward_impl.1} parent=11 // pred_check_branch
          %246 = sbr.rel (%p244) target = $region16
        $region15: #{_forward_impl.1} parent=11 // pred_region
          %s247 = smul.u32 2, %s28
          %p248 = scmp.lt.s32.totalorder %s247, 1
          %s249 = scalar_select %p248, %s247, 1
          %s250 = smul.addr %s249, 8
          %s251 = scalar_lea.vmem %s0, %s250
          %s252 = smul.u32 2, %s28
        $region16: #{_forward_impl.1} parent=11 // pred_fallthru
          _
        // Predicated region
        $region17: #{_forward_impl.1} parent=11 // pred_check
          %p253 = pneg %p84
        $region18: #{_forward_impl.1} parent=11 // pred_check_branch
          %255 = sbr.rel (%p253) target = $region20
        $region19: #{_forward_impl.1} parent=11 // pred_region
          %s257 = ssub.s32 2048, 2048
          %258 = vsyncadd [#allocation5], %s257
          %s259 = sshll.u32 [#allocation4], 4
          %s260 = int_to_ptr.vmem [resolvable:$true] %s259
          %265 = dma.hbm_to_vmem [thread:$0]  %s1, 2048, %s260, [#allocation5], 128, 128, 8
        $region20: #{_forward_impl.1} parent=11 // pred_fallthru
          _
        // Predicated region
        $region21: #{_forward_impl.1} parent=11 // pred_check
          %p266 = pneg %p105
        $region22: #{_forward_impl.1} parent=11 // pred_check_branch
          %268 = sbr.rel (%p266) target = $region24
        $region23: #{_forward_impl.1} parent=11 // pred_region
          _
        $region24: #{_forward_impl.1} parent=11 // pred_fallthru
          _
        // Predicated region
        $region25: #{_forward_impl.1} parent=11 // pred_check
          %p269 = pneg %p182
        $region26: #{_forward_impl.1} parent=11 // pred_check_branch
          %271 = sbr.rel (%p269) target = $region28
        $region27: #{_forward_impl.1} parent=11 // pred_region
          %s273 = ssub.s32 2048, 2048
          %274 = vsyncadd [#allocation8], %s273
          %s275 = sshll.u32 [#allocation9], 4
          %s276 = int_to_ptr.vmem [resolvable:$true] %s275
          %281 = dma.hbm_to_vmem [thread:$0]  %s5, 2048, %s276, [#allocation8], 128, 128, 8
        $region28: #{_forward_impl.1} parent=11 // pred_fallthru
          _
        // Predicated region
        $region29: #{_forward_impl.1} parent=11 // pred_check
          %p282 = pneg %p203
        $region30: #{_forward_impl.1} parent=11 // pred_check_branch
          %284 = sbr.rel (%p282) target = $region32
        $region31: #{_forward_impl.1} parent=11 // pred_region
          _
        $region32: #{_forward_impl.1} parent=11 // pred_fallthru
          _
      $region12: #{_forward_impl.1} parent=5 // pred_fallthru
        _
      %p285 = scmp.lt.s32.totalorder %s18, 3
      // Predicated region
      $region33: #{_forward_impl.1} parent=5 // pred_check
        %p286 = pneg %p285
      $region34: #{_forward_impl.1} parent=5 // pred_check_branch
        %288 = sbr.rel (%p286) target = $region36
      $region35: #{_forward_impl.1} parent=5 // pred_region
        // Predicated region
        $region37: #{_forward_impl.1} parent=35 // pred_check
          %p289 = pneg %p127
        $region38: #{_forward_impl.1} parent=35 // pred_check_branch
          %291 = sbr.rel (%p289) target = $region40
        $region39: #{_forward_impl.1} parent=35 // pred_region
          %s292 = sand.u32 %s18, 1
          %s293 = scalar_lea.sflag [#allocation8], %s292
          %s294 = sand.u32 %s117, 1
          %s295 = smul.addr %s294, 128
          %s296 = scalar_lea.vmem [#allocation7], %s295
          %s298 = ssub.s32 2048, 2048
          %299 = vsyncadd %s293, %s298
          %s300 = smul.addr %s26, 16
          %s301 = sadd.s32 %s27, %s300
          %s302 = smul.addr %s301, 128
          %s303 = scalar_lea.hbm %s3, %s302
          %s304 = sshll.u32 %s296, 4
          %s305 = int_to_ptr.vmem [resolvable:$true] %s304
          %310 = dma.hbm_to_vmem [thread:$0]  %s303, 2048, %s305, %s293, 128, 128, 8
        $region40: #{_forward_impl.1} parent=35 // pred_fallthru
          _
        // Predicated region
        $region41: #{_forward_impl.1} parent=35 // pred_check
          %p311 = pneg %p155
        $region42: #{_forward_impl.1} parent=35 // pred_check_branch
          %313 = sbr.rel (%p311) target = $region44
        $region43: #{_forward_impl.1} parent=35 // pred_region
          %p314 = scmp.lt.s32.totalorder %s26, 2
          %s315 = scalar_select %p314, %s26, 2
          %p316 = scmp.lt.s32.totalorder %s27, 0
          %s317 = scalar_select %p316, %s27, 0
          %s318 = sadd.s32 %s317, %s315
          %s319 = scalar_lea.vmem %s4, %s318
        $region44: #{_forward_impl.1} parent=35 // pred_fallthru
          _
      $region36: #{_forward_impl.1} parent=5 // pred_fallthru
        _
      %p320 = scmp.le.s32.totalorder 1, %s18
      %p321 = scmp.lt.s32.totalorder %s18, 4
      %p322 = pnand %p320, %p321
      %p323 = pneg %p322
      // Predicated region
      $region45: #{_forward_impl.1} parent=5 // pred_check
        _
      $region46: #{_forward_impl.1} parent=5 // pred_check_branch
        %325 = sbr.rel (%p322) target = $region48
      $region47: #{_forward_impl.1} parent=5 // pred_region
        %s326 = ssub.s32 %s18, 1
        // Predicated region
        $region49: #{_forward_impl.1} parent=47 // pred_check
          %p327 = pneg %p84
        $region50: #{_forward_impl.1} parent=47 // pred_check_branch
          %329 = sbr.rel (%p327) target = $region52
        $region51: #{_forward_impl.1} parent=47 // pred_region
          %330 = dma.done [#allocation5], 2048
        $region52: #{_forward_impl.1} parent=47 // pred_fallthru
          _
        %s331 = sand.u32 %s23, 1
        %s332 = scalar_lea.sflag [#allocation8], %s331
        %s333 = sand.u32 %s120, 1
        %s334 = smul.addr %s333, 128
        %s335 = scalar_lea.vmem [#allocation7], %s334
        // Predicated region
        $region53: #{_forward_impl.1} parent=47 // pred_check
          %p336 = pneg %p133
        $region54: #{_forward_impl.1} parent=47 // pred_check_branch
          %338 = sbr.rel (%p336) target = $region56
        $region55: #{_forward_impl.1} parent=47 // pred_region
          %339 = dma.done %s332, 2048
        $region56: #{_forward_impl.1} parent=47 // pred_fallthru
          _
        // Predicated region
        $region57: #{_forward_impl.1} parent=47 // pred_check
          %p340 = pneg %p182
        $region58: #{_forward_impl.1} parent=47 // pred_check_branch
          %342 = sbr.rel (%p340) target = $region60
        $region59: #{_forward_impl.1} parent=47 // pred_region
          %343 = dma.done [#allocation8], 2048
        $region60: #{_forward_impl.1} parent=47 // pred_fallthru
          _
        %s344 = smul.u32 2, %s28
        %p345 = scmp.lt.s32.totalorder %s344, 1
        %s346 = scalar_select %p345, %s344, 1
        %s347 = smul.addr %s346, 8
        %s348 = scalar_lea.vmem %s0, %s347
        %p349 = pneg %p63
        %p350 = pneg %p60
        %p351 = pneg %p84
        %p352 = pneg %p81
        %p353 = pneg %p105
        %p354 = pneg %p102
        %s355 = sand.u32 %s23, 1
        %s356 = scalar_lea.sflag [#allocation8], %s355
        %s357 = sand.u32 %s120, 1
        %s358 = smul.addr %s357, 128
        %s359 = scalar_lea.vmem [#allocation7], %s358
        %p360 = pneg %p133
        %p361 = pneg %p130
        %p362 = scmp.lt.s32.totalorder %s29, 2
        %s363 = scalar_select %p362, %s29, 2
        %p364 = scmp.lt.s32.totalorder %s30, 0
        %s365 = scalar_select %p364, %s30, 0
        %s366 = sadd.s32 %s365, %s363
        %s367 = scalar_lea.vmem %s4, %s366
        %p368 = pneg %p161
        %p369 = pneg %p158
        %p370 = pneg %p182
        %p371 = pneg %p179
        %p372 = pneg %p203
        %p373 = pneg %p200
        %p374 = pneg %p229
        %p375 = pneg %p226
        %s376 = smul.u32 2, %s28
        %p377 = scmp.lt.s32.totalorder %s376, 1
        %s378 = scalar_select %p377, %s376, 1
        %s379 = smul.addr %s378, 8
        %s380 = scalar_lea.vmem %s0, %s379
        %s381 = smul.u32 2, %s28
        %p382 = scmp.lt.s32.totalorder %s29, 2
        %s383 = scalar_select %p382, %s29, 2
        %p384 = scmp.lt.s32.totalorder %s30, 0
        %s385 = scalar_select %p384, %s30, 0
        %s386 = sadd.s32 %s385, %s383
        %s387 = scalar_lea.vmem %s4, %s386
        %s388 = smul.u32 2, %s28
        %p389 = scmp.eq.s32.totalorder %s29, 0
        %p390 = scmp.eq.s32.totalorder %s30, 0
        %p391 = pnand %p389, %p390
        %p392 = pneg %p391
        // Predicated region
        $region61: #{_forward_impl.1} parent=47 // pred_check
          _
        $region62: #{_forward_impl.1} parent=47 // pred_check_branch
          %394 = sbr.rel (%p391) target = $region64
        $region63: #{_forward_impl.1} parent=47 // pred_region
          %v395 = vld [vmem:[%s380] sm:$0xff]
          %v396 = vld [vmem:[%s380 + $0x8] sm:$0xff]
          %v397 = vld [vmem:[#allocation4] sm:$0xff]
          %v398 = vld [vmem:[#allocation4 + $0x8] sm:$0xff]
          %v399 = vld [vmem:[#allocation4 + $0x10] sm:$0xff]
          %v400 = vld [vmem:[#allocation4 + $0x18] sm:$0xff]
          %v401 = vld [vmem:[#allocation4 + $0x20] sm:$0xff]
          %v402 = vld [vmem:[#allocation4 + $0x28] sm:$0xff]
          %v403 = vld [vmem:[#allocation4 + $0x30] sm:$0xff]
          %v404 = vld [vmem:[#allocation4 + $0x38] sm:$0xff]
          %v405 = vld [vmem:[#allocation4 + $0x40] sm:$0xff]
          %v406 = vld [vmem:[#allocation4 + $0x48] sm:$0xff]
          %v407 = vld [vmem:[#allocation4 + $0x50] sm:$0xff]
          %v408 = vld [vmem:[#allocation4 + $0x58] sm:$0xff]
          %v409 = vld [vmem:[#allocation4 + $0x60] sm:$0xff]
          %v410 = vld [vmem:[#allocation4 + $0x68] sm:$0xff]
          %v411 = vld [vmem:[#allocation4 + $0x70] sm:$0xff]
          %v412 = vld [vmem:[#allocation4 + $0x78] sm:$0xff]
          %v413 = vld [vmem:[%s2] sm:$0x1]
          %v415 = vlaneseq
          %v416 = vshrl.u32 %v415, 7
          %v417 = vsub.s32 0, %v416
          %v418 = vrot.slane %v413, %v417
          %420 = vmatprep.subr.mxu0 0.0
          %421 = vmatpush1.msra.mxu0 %v412
          %422 = vmatprep.subr.mxu0 0.0
          %423 = vmatpush1.msra.mxu0 %v411
          %424 = vmatprep.subr.mxu0 0.0
          %425 = vmatpush1.msra.mxu0 %v410
          %426 = vmatprep.subr.mxu0 0.0
          %427 = vmatpush1.msra.mxu0 %v409
          %428 = vmatprep.subr.mxu0 0.0
          %429 = vmatpush1.msra.mxu0 %v408
          %430 = vmatprep.subr.mxu0 0.0
          %431 = vmatpush1.msra.mxu0 %v407
          %432 = vmatprep.subr.mxu0 0.0
          %433 = vmatpush1.msra.mxu0 %v406
          %434 = vmatprep.subr.mxu0 0.0
          %435 = vmatpush1.msra.mxu0 %v405
          %436 = vmatprep.subr.mxu0 0.0
          %437 = vmatpush1.msra.mxu0 %v404
          %438 = vmatprep.subr.mxu0 0.0
          %439 = vmatpush1.msra.mxu0 %v403
          %440 = vmatprep.subr.mxu0 0.0
          %441 = vmatpush1.msra.mxu0 %v402
          %442 = vmatprep.subr.mxu0 0.0
          %443 = vmatpush1.msra.mxu0 %v401
          %444 = vmatprep.subr.mxu0 0.0
          %445 = vmatpush1.msra.mxu0 %v400
          %446 = vmatprep.subr.mxu0 0.0
          %447 = vmatpush1.msra.mxu0 %v399
          %448 = vmatprep.subr.mxu0 0.0
          %449 = vmatpush1.msra.mxu0 %v398
          %450 = vmatprep.subr.mxu0 0.0
          %451 = vmatpush1.msra.mxu0 %v397
          %452 = vmatprep.subr.mxu0 0.0
          %453 = vmatpush2.msra.mxu0 0.0
          %454 = vmatprep.subr.mxu0 0.0
          %455 = vmatpush2.msra.mxu0 0.0
          %456 = vmatprep.subr.mxu0 0.0
          %457 = vmatpush2.msra.mxu0 0.0
          %458 = vmatprep.subr.mxu0 0.0
          %459 = vmatpush2.msra.mxu0 0.0
          %460 = vmatprep.subr.mxu0 0.0
          %461 = vmatpush2.msra.mxu0 0.0
          %462 = vmatprep.subr.mxu0 0.0
          %463 = vmatpush2.msra.mxu0 0.0
          %464 = vmatprep.subr.mxu0 0.0
          %465 = vmatpush2.msra.mxu0 0.0
          %466 = vmatprep.subr.mxu0 0.0
          %467 = vmatpush2.msra.mxu0 0.0
          %468 = vmatprep.subr.mxu0 0.0
          %469 = vmatpush2.msra.mxu0 0.0
          %470 = vmatprep.subr.mxu0 0.0
          %471 = vmatpush2.msra.mxu0 0.0
          %472 = vmatprep.subr.mxu0 0.0
          %473 = vmatpush2.msra.mxu0 0.0
          %474 = vmatprep.subr.mxu0 0.0
          %475 = vmatpush2.msra.mxu0 0.0
          %476 = vmatprep.subr.mxu0 0.0
          %477 = vmatpush2.msra.mxu0 0.0
          %478 = vmatprep.subr.mxu0 0.0
          %479 = vmatpush2.msra.mxu0 0.0
          %480 = vmatprep.subr.mxu0 0.0
          %481 = vmatpush2.msra.mxu0 0.0
          %482 = vmatprep.subr.mxu0 0.0
          %483 = vmatpush2.msra.mxu0 0.0
          %484 = vmatprep.mubr.f32.mxu0 0.0
          %485 = vmatmul.mubr.f32.gmra.mxu0 %v395
          %v486 = vpop.f32.mrf.mxu0
          %v487 = vadd.f32 %v418, %v486
          %v488 = vpop.f32.mrf.mxu0
          %489 = vmatprep.mubr.f32.mxu0 0.0
          %490 = vmatmul.mubr.f32.gmra.mxu0 %v396
          %v491 = vpop.f32.mrf.mxu0
          %v492 = vadd.f32 %v418, %v491
          %v493 = vpop.f32.mrf.mxu0
          %494 = vdwg.mxu0
          %495 = vst [vmem:[#allocation2] sm:$0xff] %v487
          %496 = vst [vmem:[#allocation2 + $0x8] sm:$0xff] %v492
        $region64: #{_forward_impl.1} parent=47 // pred_fallthru
          _
        %v497 = vld [vmem:[#allocation2] sm:$0xff]
        %v498 = vld [vmem:[#allocation2 + $0x8] sm:$0xff]
        %v499 = vld [vmem:[%s335] sm:$0xff]
        %v500 = vld [vmem:[%s335 + $0x8] sm:$0xff]
        %v501 = vld [vmem:[%s335 + $0x10] sm:$0xff]
        %v502 = vld [vmem:[%s335 + $0x18] sm:$0xff]
        %v503 = vld [vmem:[%s335 + $0x20] sm:$0xff]
        %v504 = vld [vmem:[%s335 + $0x28] sm:$0xff]
        %v505 = vld [vmem:[%s335 + $0x30] sm:$0xff]
        %v506 = vld [vmem:[%s335 + $0x38] sm:$0xff]
        %v507 = vld [vmem:[%s335 + $0x40] sm:$0xff]
        %v508 = vld [vmem:[%s335 + $0x48] sm:$0xff]
        %v509 = vld [vmem:[%s335 + $0x50] sm:$0xff]
        %v510 = vld [vmem:[%s335 + $0x58] sm:$0xff]
        %v511 = vld [vmem:[%s335 + $0x60] sm:$0xff]
        %v512 = vld [vmem:[%s335 + $0x68] sm:$0xff]
        %v513 = vld [vmem:[%s335 + $0x70] sm:$0xff]
        %v514 = vld [vmem:[%s335 + $0x78] sm:$0xff]
        %v515 = vld [vmem:[%s387] sm:$0x1]
        %v517 = vlaneseq
        %v518 = vshrl.u32 %v517, 7
        %v519 = vsub.s32 0, %v518
        %v520 = vrot.slane %v515, %v519
        %522 = vmatprep.subr.mxu0 0.0
        %523 = vmatpush1.msra.mxu0 %v514
        %524 = vmatprep.subr.mxu0 0.0
        %525 = vmatpush1.msra.mxu0 %v513
        %526 = vmatprep.subr.mxu0 0.0
        %527 = vmatpush1.msra.mxu0 %v512
        %528 = vmatprep.subr.mxu0 0.0
        %529 = vmatpush1.msra.mxu0 %v511
        %530 = vmatprep.subr.mxu0 0.0
        %531 = vmatpush1.msra.mxu0 %v510
        %532 = vmatprep.subr.mxu0 0.0
        %533 = vmatpush1.msra.mxu0 %v509
        %534 = vmatprep.subr.mxu0 0.0
        %535 = vmatpush1.msra.mxu0 %v508
        %536 = vmatprep.subr.mxu0 0.0
        %537 = vmatpush1.msra.mxu0 %v507
        %538 = vmatprep.subr.mxu0 0.0
        %539 = vmatpush1.msra.mxu0 %v506
        %540 = vmatprep.subr.mxu0 0.0
        %541 = vmatpush1.msra.mxu0 %v505
        %542 = vmatprep.subr.mxu0 0.0
        %543 = vmatpush1.msra.mxu0 %v504
        %544 = vmatprep.subr.mxu0 0.0
        %545 = vmatpush1.msra.mxu0 %v503
        %546 = vmatprep.subr.mxu0 0.0
        %547 = vmatpush1.msra.mxu0 %v502
        %548 = vmatprep.subr.mxu0 0.0
        %549 = vmatpush1.msra.mxu0 %v501
        %550 = vmatprep.subr.mxu0 0.0
        %551 = vmatpush1.msra.mxu0 %v500
        %552 = vmatprep.subr.mxu0 0.0
        %553 = vmatpush1.msra.mxu0 %v499
        %554 = vmatprep.subr.mxu0 0.0
        %555 = vmatpush2.msra.mxu0 0.0
        %556 = vmatprep.subr.mxu0 0.0
        %557 = vmatpush2.msra.mxu0 0.0
        %558 = vmatprep.subr.mxu0 0.0
        %559 = vmatpush2.msra.mxu0 0.0
        %560 = vmatprep.subr.mxu0 0.0
        %561 = vmatpush2.msra.mxu0 0.0
        %562 = vmatprep.subr.mxu0 0.0
        %563 = vmatpush2.msra.mxu0 0.0
        %564 = vmatprep.subr.mxu0 0.0
        %565 = vmatpush2.msra.mxu0 0.0
        %566 = vmatprep.subr.mxu0 0.0
        %567 = vmatpush2.msra.mxu0 0.0
        %568 = vmatprep.subr.mxu0 0.0
        %569 = vmatpush2.msra.mxu0 0.0
        %570 = vmatprep.subr.mxu0 0.0
        %571 = vmatpush2.msra.mxu0 0.0
        %572 = vmatprep.subr.mxu0 0.0
        %573 = vmatpush2.msra.mxu0 0.0
        %574 = vmatprep.subr.mxu0 0.0
        %575 = vmatpush2.msra.mxu0 0.0
        %576 = vmatprep.subr.mxu0 0.0
        %577 = vmatpush2.msra.mxu0 0.0
        %578 = vmatprep.subr.mxu0 0.0
        %579 = vmatpush2.msra.mxu0 0.0
        %580 = vmatprep.subr.mxu0 0.0
        %581 = vmatpush2.msra.mxu0 0.0
        %582 = vmatprep.subr.mxu0 0.0
        %583 = vmatpush2.msra.mxu0 0.0
        %584 = vmatprep.subr.mxu0 0.0
        %585 = vmatpush2.msra.mxu0 0.0
        %586 = vmatprep.mubr.f32.mxu0 0.0
        %587 = vmatmul.mubr.f32.gmra.mxu0 %v497
        %v588 = vpop.f32.mrf.mxu0
        %v589 = vadd.f32 %v520, %v588
        %v590 = vpop.f32.mrf.mxu0
        %591 = vmatprep.mubr.f32.mxu0 0.0
        %592 = vmatmul.mubr.f32.gmra.mxu0 %v498
        %v593 = vpop.f32.mrf.mxu0
        %v594 = vadd.f32 %v520, %v593
        %v595 = vpop.f32.mrf.mxu0
        %596 = vdwg.mxu0
        %v597 = vmax.f32 %v589, 0.0
        %v598 = vmax.f32 %v594, 0.0
        %599 = vst [vmem:[#allocation3] sm:$0xff] %v597
        %600 = vst [vmem:[#allocation3 + $0x8] sm:$0xff] %v598
        // Predicated region
        $region65: #{_forward_impl.1} parent=47 // pred_check
          %p601 = pneg %p390
        $region66: #{_forward_impl.1} parent=47 // pred_check_branch
          %603 = sbr.rel (%p601) target = $region68
        $region67: #{_forward_impl.1} parent=47 // pred_region
          %v604 = vld [vmem:[#allocation3] sm:$0xff]
          %v605 = vld [vmem:[#allocation3 + $0x8] sm:$0xff]
          %606 = vst [vmem:[#allocation2] sm:$0xff] %v604
          %607 = vst [vmem:[#allocation2 + $0x8] sm:$0xff] %v605
        $region68: #{_forward_impl.1} parent=47 // pred_fallthru
          _
        %p608 = scmp.eq.s32.totalorder %s29, 2
        %p609 = pnand %p608, %p390
        %p610 = pneg %p609
        // Predicated region
        $region69: #{_forward_impl.1} parent=47 // pred_check
          _
        $region70: #{_forward_impl.1} parent=47 // pred_check_branch
          %612 = sbr.rel (%p609) target = $region72
        $region71: #{_forward_impl.1} parent=47 // pred_region
          %v613 = vld [vmem:[#allocation2] sm:$0xff]
          %v614 = vld [vmem:[#allocation2 + $0x8] sm:$0xff]
          %v615 = vld [vmem:[#allocation9] sm:$0xff]
          %v616 = vld [vmem:[#allocation9 + $0x8] sm:$0xff]
          %v617 = vld [vmem:[#allocation9 + $0x10] sm:$0xff]
          %v618 = vld [vmem:[#allocation9 + $0x18] sm:$0xff]
          %v619 = vld [vmem:[#allocation9 + $0x20] sm:$0xff]
          %v620 = vld [vmem:[#allocation9 + $0x28] sm:$0xff]
          %v621 = vld [vmem:[#allocation9 + $0x30] sm:$0xff]
          %v622 = vld [vmem:[#allocation9 + $0x38] sm:$0xff]
          %v623 = vld [vmem:[#allocation9 + $0x40] sm:$0xff]
          %v624 = vld [vmem:[#allocation9 + $0x48] sm:$0xff]
          %v625 = vld [vmem:[#allocation9 + $0x50] sm:$0xff]
          %v626 = vld [vmem:[#allocation9 + $0x58] sm:$0xff]
          %v627 = vld [vmem:[#allocation9 + $0x60] sm:$0xff]
          %v628 = vld [vmem:[#allocation9 + $0x68] sm:$0xff]
          %v629 = vld [vmem:[#allocation9 + $0x70] sm:$0xff]
          %v630 = vld [vmem:[#allocation9 + $0x78] sm:$0xff]
          %v631 = vld [vmem:[%s6] sm:$0x1]
          %v633 = vlaneseq
          %v634 = vshrl.u32 %v633, 7
          %v635 = vsub.s32 0, %v634
          %v636 = vrot.slane %v631, %v635
          %638 = vmatprep.subr.mxu0 0.0
          %639 = vmatpush1.msra.mxu0 %v630
          %640 = vmatprep.subr.mxu0 0.0
          %641 = vmatpush1.msra.mxu0 %v629
          %642 = vmatprep.subr.mxu0 0.0
          %643 = vmatpush1.msra.mxu0 %v628
          %644 = vmatprep.subr.mxu0 0.0
          %645 = vmatpush1.msra.mxu0 %v627
          %646 = vmatprep.subr.mxu0 0.0
          %647 = vmatpush1.msra.mxu0 %v626
          %648 = vmatprep.subr.mxu0 0.0
          %649 = vmatpush1.msra.mxu0 %v625
          %650 = vmatprep.subr.mxu0 0.0
          %651 = vmatpush1.msra.mxu0 %v624
          %652 = vmatprep.subr.mxu0 0.0
          %653 = vmatpush1.msra.mxu0 %v623
          %654 = vmatprep.subr.mxu0 0.0
          %655 = vmatpush1.msra.mxu0 %v622
          %656 = vmatprep.subr.mxu0 0.0
          %657 = vmatpush1.msra.mxu0 %v621
          %658 = vmatprep.subr.mxu0 0.0
          %659 = vmatpush1.msra.mxu0 %v620
          %660 = vmatprep.subr.mxu0 0.0
          %661 = vmatpush1.msra.mxu0 %v619
          %662 = vmatprep.subr.mxu0 0.0
          %663 = vmatpush1.msra.mxu0 %v618
          %664 = vmatprep.subr.mxu0 0.0
          %665 = vmatpush1.msra.mxu0 %v617
          %666 = vmatprep.subr.mxu0 0.0
          %667 = vmatpush1.msra.mxu0 %v616
          %668 = vmatprep.subr.mxu0 0.0
          %669 = vmatpush1.msra.mxu0 %v615
          %670 = vmatprep.subr.mxu0 0.0
          %671 = vmatpush2.msra.mxu0 0.0
          %672 = vmatprep.subr.mxu0 0.0
          %673 = vmatpush2.msra.mxu0 0.0
          %674 = vmatprep.subr.mxu0 0.0
          %675 = vmatpush2.msra.mxu0 0.0
          %676 = vmatprep.subr.mxu0 0.0
          %677 = vmatpush2.msra.mxu0 0.0
          %678 = vmatprep.subr.mxu0 0.0
          %679 = vmatpush2.msra.mxu0 0.0
          %680 = vmatprep.subr.mxu0 0.0
          %681 = vmatpush2.msra.mxu0 0.0
          %682 = vmatprep.subr.mxu0 0.0
          %683 = vmatpush2.msra.mxu0 0.0
          %684 = vmatprep.subr.mxu0 0.0
          %685 = vmatpush2.msra.mxu0 0.0
          %686 = vmatprep.subr.mxu0 0.0
          %687 = vmatpush2.msra.mxu0 0.0
          %688 = vmatprep.subr.mxu0 0.0
          %689 = vmatpush2.msra.mxu0 0.0
          %690 = vmatprep.subr.mxu0 0.0
          %691 = vmatpush2.msra.mxu0 0.0
          %692 = vmatprep.subr.mxu0 0.0
          %693 = vmatpush2.msra.mxu0 0.0
          %694 = vmatprep.subr.mxu0 0.0
          %695 = vmatpush2.msra.mxu0 0.0
          %696 = vmatprep.subr.mxu0 0.0
          %697 = vmatpush2.msra.mxu0 0.0
          %698 = vmatprep.subr.mxu0 0.0
          %699 = vmatpush2.msra.mxu0 0.0
          %700 = vmatprep.subr.mxu0 0.0
          %701 = vmatpush2.msra.mxu0 0.0
          %702 = vmatprep.mubr.f32.mxu0 0.0
          %703 = vmatmul.mubr.f32.gmra.mxu0 %v613
          %v704 = vpop.f32.mrf.mxu0
          %v705 = vadd.f32 %v636, %v704
          %v706 = vpop.f32.mrf.mxu0
          %707 = vmatprep.mubr.f32.mxu0 0.0
          %708 = vmatmul.mubr.f32.gmra.mxu0 %v614
          %v709 = vpop.f32.mrf.mxu0
          %v710 = vadd.f32 %v636, %v709
          %v711 = vpop.f32.mrf.mxu0
          %712 = vdwg.mxu0
          %713 = vst [vmem:[#allocation10] sm:$0xff] %v705
          %714 = vst [vmem:[#allocation10 + $0x8] sm:$0xff] %v710
        $region72: #{_forward_impl.1} parent=47 // pred_fallthru
          _
        // Predicated region
        $region73: #{_forward_impl.1} parent=47 // pred_check
          %p715 = pneg %p226
        $region74: #{_forward_impl.1} parent=47 // pred_check_branch
          %717 = sbr.rel (%p715) target = $region76
        $region75: #{_forward_impl.1} parent=47 // pred_region
          %s718 = smul.u32 2, %s28
          %s720 = ssub.s32 256, 256
          %721 = vsyncadd [#allocation6], %s720
          %s722 = smul.addr %s718, 128
          %s723 = scalar_lea.hbm %s7, %s722
          %s724 = sshll.u32 [#allocation10], 4
          %s725 = int_to_ptr.vmem [resolvable:$true] %s724
          %730 = dma.vmem_to_hbm [thread:$0]  %s725, 256, %s723, [#allocation6], 128, 128, 8
        $region76: #{_forward_impl.1} parent=47 // pred_fallthru
          _
        // Predicated region
        $region77: #{_forward_impl.1} parent=47 // pred_check
          %p731 = pneg %p226
        $region78: #{_forward_impl.1} parent=47 // pred_check_branch
          %733 = sbr.rel (%p731) target = $region80
        $region79: #{_forward_impl.1} parent=47 // pred_region
          %734 = dma.done [#allocation6], 256
        $region80: #{_forward_impl.1} parent=47 // pred_fallthru
          _
      $region48: #{_forward_impl.1} parent=5 // pred_fallthru
        _
      %p735 = scmp.le.s32.totalorder 2, %s18
      // Predicated region
      $region81: #{_forward_impl.1} parent=5 // pred_check
        %p736 = pneg %p735
      $region82: #{_forward_impl.1} parent=5 // pred_check_branch
        %738 = sbr.rel (%p736) target = $region84
      $region83: #{_forward_impl.1} parent=5 // pred_region
        %s739 = ssub.s32 %s18, 2
      $region84: #{_forward_impl.1} parent=5 // pred_fallthru
        _
    $region6: #{_forward_impl.1} parent=1 // loop_footer
      %s22 = sadd.s32 1, %s18
    $region7: #{_forward_impl.1} parent=1 // loop_footer_branch
      %17 = sbr.rel target = $region3
    $region8: #{_forward_impl.1} parent=1 // loop_exit
      _
    %740 = vsyncpa [#allocation5], 1
    %s741 = scalar_lea.sflag [#allocation5], 1
    %742 = vsyncpa %s741, 1
    %743 = vsyncpa [#allocation8], 1
    %s744 = scalar_lea.sflag [#allocation8], 1
    %745 = vsyncpa %s744, 1
    %746 = vsyncpa [#allocation6], 1
    %s747 = scalar_lea.sflag [#allocation6], 1
    %748 = vsyncpa %s747, 1

</llo_original>
